<compile_context>
chip_gen: v5e
topology: v5e:2x2
jax: 0.10.0
libtpu: 0.0.40
codegen_flags: <defaults>
</compile_context>

<pallas_src>
import functools

import jax
import jax.numpy as jnp
from jax import lax
from jax.experimental import pallas as pl
from jax.experimental.pallas import tpu as pltpu


COUTP = 128  # lane-dense padded output-channel count (multiple of 128)


# ---------------------------------------------------------------------------
# Fused kernel: conv3x3+bias+ReLU -> conv3x3+bias+ReLU, one image per grid step
# ---------------------------------------------------------------------------
def _make_fused_kernel(m_ext, wp, mid, lead, flat2, tm):
    off = lead + wp + 1            # h scatter offset inside hp (8-aligned by LEAD)
    n_chunks = m_ext // tm
    top_rows = off                 # border rows that must be zero (above h)
    bot_start = off + m_ext
    bot_rows = flat2 - bot_start   # border rows that must be zero (below h)

    def kernel(xcol_ref, w1_ref, w2_ref, o_ref, hp_ref):
        # Zero ONLY the border rows of the padded layer-1 activation map.
        # Unconditional every grid step: under megacore each core owns its own
        # scratch, so this must not be gated on program_id.
        hp_ref[pl.ds(0, top_rows), :] = jnp.zeros((top_rows, mid), jnp.float32)
        hp_ref[pl.ds(bot_start, bot_rows), :] = jnp.zeros((bot_rows, mid),
                                                          jnp.float32)

        # ---- layer 1: 3x3 conv (+bias folded into the extra K rows) + ReLU --
        for c in range(n_chunks):
            r0 = c * tm
            a = xcol_ref[0, pl.ds(r0, tm), :]                 # (tm, 10*cin) bf16
            h = jnp.dot(a, w1_ref[...], preferred_element_type=jnp.float32)
            # wrapped columns were masked in the im2col (incl. bias column),
            # so ReLU(h) is exactly zero there -> hp holds true zero padding.
            hp_ref[pl.ds(off + r0, tm), :] = jnp.maximum(h, 0.0)   # aligned store

        # ---- layer 2: 3x3 conv as ONE K=9*mid(+mid bias) dot per row chunk --
        ones = jnp.ones((tm, mid), jnp.float32)               # bias column block
        for c in range(n_chunks):
            r0 = c * tm
            lhs = jnp.concatenate(
                [hp_ref[pl.ds(lead + (k // 3) * wp + (k % 3) + r0, tm), :]
                 for k in range(9)] + [ones],
                axis=-1).astype(jnp.bfloat16)                  # (tm, 10*mid) bf16
            y = jnp.dot(lhs, w2_ref[...], preferred_element_type=jnp.float32)
            # lane-dense (128) bf16 output store
            o_ref[0, pl.ds(r0, tm), :] = jnp.maximum(y, 0.0).astype(o_ref.dtype)

    return kernel


# ---------------------------------------------------------------------------
# Wrapper: single fused pallas_call for the whole 2-layer backbone
# ---------------------------------------------------------------------------
def cnn2_fused_pallas(x_nhwc, w1_pt, b1, w2_pt, b2):
    """x_nhwc: (B, H, W, Cin); w*_pt: PyTorch (Cout, Cin, 3, 3); returns
    (B, H, W, Cout) f32 = ReLU(conv2(ReLU(conv1(x)))) with stride 1, SAME pad."""
    B, H, W, CIN = map(int, x_nhwc.shape)
    MID = int(w1_pt.shape[0])
    COUT = int(w2_pt.shape[0])
    assert COUT <= COUTP and MID == int(w2_pt.shape[1]) and CIN == int(w1_pt.shape[1])

    HP, WP = H + 2, W + 2
    M_EXT = H * WP                          # extended output rows (incl. 2 wrap cols/row)
    assert M_EXT % 8 == 0
    # row-chunk that divides M_EXT and keeps accumulators small (and 8-aligned)
    TM = M_EXT // 2 if (M_EXT % 16 == 0 and M_EXT >= 256) else M_EXT
    assert M_EXT % TM == 0 and TM % 8 == 0

    LEAD = (-(WP + 1)) % 8                  # lead pad so h scatter offset is 8-aligned
    FLAT2 = ((LEAD + 2 * WP + 2 + M_EXT + 7) // 8) * 8   # padded hp scratch rows

    # ---- zero-padded, row-flattened bf16 input (single cast, done here) -----
    xb = x_nhwc.astype(jnp.bfloat16)
    xp = jnp.pad(xb, ((0, 0), (1, 1), (1, 1), (0, 0)))          # (B, HP, WP, CIN)
    xflat = xp.reshape(B, HP * WP, CIN)
    tail = 2 * WP + 2 + M_EXT - HP * WP                          # slice-overrun slack
    if tail > 0:
        xflat = jnp.pad(xflat, ((0, 0), (0, tail), (0, 0)))

    # ---- layer-1 im2col over extended rows; bias rides as extra "tap" block -
    offs = [i * WP + j for i in range(3) for j in range(3)]
    mask = ((jnp.arange(M_EXT) % WP) < W).astype(jnp.bfloat16)   # kill wrapped cols
    xcol = jnp.concatenate(
        [xflat[:, s:s + M_EXT, :] for s in offs]
        + [jnp.ones((B, M_EXT, CIN), jnp.bfloat16)],             # bias/mask block
        axis=-1)                                                  # (B, M_EXT, 10*CIN)
    xcol = xcol * mask[None, :, None]

    # ---- weights in im2col layout, biases folded into the trailing K rows ---
    w1c = jnp.transpose(w1_pt, (2, 3, 1, 0)).reshape(9 * CIN, MID)
    w1_aug = jnp.concatenate(
        [w1c, b1.reshape(1, MID).astype(w1c.dtype),
         jnp.zeros((CIN - 1, MID), w1c.dtype)], axis=0).astype(jnp.bfloat16)

    w2c = jnp.transpose(w2_pt, (2, 3, 1, 0)).reshape(9 * MID, COUT)
    w2_aug = jnp.concatenate(
        [w2c, b2.reshape(1, COUT).astype(w2c.dtype),
         jnp.zeros((MID - 1, COUT), w2c.dtype)], axis=0)
    w2_aug = jnp.pad(w2_aug, ((0, 0), (0, COUTP - COUT))).astype(jnp.bfloat16)

    kernel = _make_fused_kernel(M_EXT, WP, MID, LEAD, FLAT2, TM)

    flops = 2 * B * M_EXT * 9 * (CIN * MID + MID * COUT)          # real conv flops
    bytes_accessed = (xcol.size * 2 + w1_aug.size * 2 + w2_aug.size * 2
                      + B * M_EXT * COUTP * 2)

    out_ext = pl.pallas_call(
        kernel,
        out_shape=jax.ShapeDtypeStruct((B, M_EXT, COUTP), jnp.bfloat16),
        grid_spec=pltpu.PrefetchScalarGridSpec(
            num_scalar_prefetch=0,
            grid=(B,),                                   # one image per step / per core
            in_specs=[
                pl.BlockSpec((1, M_EXT, 10 * CIN), lambda b: (b, 0, 0)),
                pl.BlockSpec((10 * CIN, MID), lambda b: (0, 0)),
                pl.BlockSpec((10 * MID, COUTP), lambda b: (0, 0)),
            ],
            out_specs=pl.BlockSpec((1, M_EXT, COUTP), lambda b: (b, 0, 0)),
            scratch_shapes=[pltpu.VMEM((FLAT2, MID), jnp.float32)],
        ),
        compiler_params=pltpu.CompilerParams(
            dimension_semantics=("parallel",),
            vmem_limit_bytes=32 * 1024 * 1024,
        ),
        cost_estimate=pl.CostEstimate(
            flops=flops, transcendentals=0, bytes_accessed=bytes_accessed),
    )(xcol, w1_aug, w2_aug)

    # strip W-pad columns and channel padding; hand back f32 like the torch module
    return out_ext.reshape(B, H, WP, COUTP)[:, :, :W, :COUT].astype(jnp.float32)


# ---------------------------------------------------------------------------
# CNN module equivalent (frozen backbone, dropout p=0.0 -> identity)
# ---------------------------------------------------------------------------
@functools.partial(jax.jit, static_argnames=("permute",))
def _cnn_forward(images_nchw, w1, b1, w2, b2, *, permute):
    # single NCHW -> NHWC transpose; activations stay NHWC end-to-end
    x = jnp.transpose(images_nchw, (0, 2, 3, 1))
    x = cnn2_fused_pallas(x, w1, b1, w2, b2)              # (B, H, W, Cout) f32
    B, H, W, C = x.shape
    if permute == "no_permute":
        return jnp.transpose(x, (0, 3, 1, 2))             # back to NCHW, like torch
    flat = x.reshape(B, H * W, C)       # == out.view(B, C, -1).permute(0, 2, 1)
    if permute == "batch_first":
        if flat.shape[1] == 1:
            flat = flat[:, 0, :]
        return flat
    return jnp.transpose(flat, (1, 0, 2))                 # spatial_first: (HW, B, C)


class CNNPallas:
    """Equivalent of vilmedic CNN with a small frozen 2-layer conv backbone.

    freeze=True forces eval mode and dropout_out=0.0, so nn.Dropout is the
    identity here (no RNG needed).
    """

    def __init__(self, key, in_ch=4, mid_ch=8, out_ch=16,
                 permute="batch_first", dropout_out=0.0):
        assert permute in ["batch_first", "spatial_first", "no_permute"]
        self.permute = permute
        self.dropout_out = dropout_out  # identity in eval mode / p=0.0
        k1, k2, k3, k4 = jax.random.split(key, 4)
        # deterministic synthetic weights, PyTorch conv weight shapes
        self.w1 = 0.1 * jax.random.normal(k1, (mid_ch, in_ch, 3, 3), jnp.float32)
        self.b1 = 0.1 * jax.random.normal(k2, (mid_ch,), jnp.float32)
        self.w2 = 0.1 * jax.random.normal(k3, (out_ch, mid_ch, 3, 3), jnp.float32)
        self.b2 = 0.1 * jax.random.normal(k4, (out_ch,), jnp.float32)

    def __call__(self, images_nchw):
        return _cnn_forward(images_nchw, self.w1, self.b1, self.w2, self.b2,
                            permute=self.permute)


# ---------------------------------------------------------------------------
# pure-JAX reference (lax.conv, f32) for correctness check
# ---------------------------------------------------------------------------
def _ref_forward(model, images_nchw):
    x = jnp.transpose(images_nchw, (0, 2, 3, 1)).astype(jnp.float32)

    def conv(x, w, b):
        w_hwio = jnp.transpose(w, (2, 3, 1, 0))
        y = lax.conv_general_dilated(
            x, w_hwio, window_strides=(1, 1), padding="SAME",
            dimension_numbers=("NHWC", "HWIO", "NHWC"))
        return jnp.maximum(y + b, 0.0)

    x = conv(x, model.w1, model.b1)
    x = conv(x, model.w2, model.b2)
    B, H, W, C = x.shape
    return x.reshape(B, H * W, C)


if __name__ == "__main__":
    key = jax.random.PRNGKey(0)
    kparam, kdata = jax.random.split(key)

    model = CNNPallas(kparam, in_ch=4, mid_ch=8, out_ch=16,
                      permute="batch_first", dropout_out=0.0)

    # small NCHW input, PyTorch convention: (batch=2, channels=4, 16, 16)
    images = jax.random.normal(kdata, (2, 4, 16, 16), jnp.float32)

    out = jax.block_until_ready(model(images))
    assert out.shape == (2, 16 * 16, 16), out.shape

    ref = jax.block_until_ready(_ref_forward(model, images))
    # bf16 MXU inputs + bf16 output store with f32 accumulation -> widened tol
    assert jnp.allclose(out, ref, atol=3e-2, rtol=3e-2), "mismatch vs reference"

    print("KERNEL_OK")
</pallas_src>

<mosaic_0001>
module attributes {stable_mosaic.version = 11 : i64} {
  func.func @kernel(%arg0: i32, %arg1: memref<1x288x40xbf16, #tpu.memory_space<vmem>>, %arg2: memref<40x8xbf16, #tpu.memory_space<vmem>>, %arg3: memref<80x128xbf16, #tpu.memory_space<vmem>>, %arg4: memref<1x288x128xbf16, #tpu.memory_space<vmem>>, %arg5: memref<336x8xf32, #tpu.memory_space<vmem>>) attributes {dimension_semantics = [#tpu.dimension_semantics<parallel>], iteration_bounds = array<i64: 2>, scalar_prefetch = 0 : i64, scratch_operands = 1 : i64, tpu.core_type = #tpu.core_type<tc>, window_params = [{transform_indices = @transform_0, window_bounds = array<i64: 1, 288, 40>}, {pipeline_mode = #tpu.pipeline_mode<synchronous>, transform_indices = @transform_1, window_bounds = array<i64: 40, 8>}, {pipeline_mode = #tpu.pipeline_mode<synchronous>, transform_indices = @transform_2, window_bounds = array<i64: 80, 128>}, {transform_indices = @transform_3, window_bounds = array<i64: 1, 288, 128>}]} {
    %cst = arith.constant 0.000000e+00 : f32
    %0 = vector.broadcast %cst : f32 to vector<24x8xf32>
    %c0 = arith.constant 0 : index
    %c0_0 = arith.constant 0 : index
    %1 = vector.load %arg5[%c0, %c0_0] : memref<336x8xf32, #tpu.memory_space<vmem>>, vector<24x8xf32>
    tpu.vector_store %arg5[%c0, %c0_0], %0 {strides = array<i32>} : memref<336x8xf32, #tpu.memory_space<vmem>>, vector<24x8xf32>,
    %cst_1 = arith.constant 0.000000e+00 : f32
    %2 = vector.broadcast %cst_1 : f32 to vector<24x8xf32>
    %c312 = arith.constant 312 : index
    %c0_2 = arith.constant 0 : index
    %3 = vector.load %arg5[%c312, %c0_2] : memref<336x8xf32, #tpu.memory_space<vmem>>, vector<24x8xf32>
    tpu.vector_store %arg5[%c312, %c0_2], %2 {strides = array<i32>} : memref<336x8xf32, #tpu.memory_space<vmem>>, vector<24x8xf32>,
    %c0_3 = arith.constant 0 : index
    %c0_4 = arith.constant 0 : index
    %c0_5 = arith.constant 0 : index
    %4 = vector.load %arg1[%c0_3, %c0_4, %c0_5] : memref<1x288x40xbf16, #tpu.memory_space<vmem>>, vector<1x144x40xbf16>
    %5 = vector.shape_cast %4 : vector<1x144x40xbf16> to vector<144x40xbf16>
    %c0_6 = arith.constant 0 : index
    %c0_7 = arith.constant 0 : index
    %6 = vector.load %arg2[%c0_6, %c0_7] : memref<40x8xbf16, #tpu.memory_space<vmem>>, vector<40x8xbf16>
    %cst_8 = arith.constant dense<0.000000e+00> : vector<144x8xf32>
    %7 = tpu.matmul %5, %6, %cst_8 {dimension_numbers = #tpu.dot_dimension_numbers<[1], [0], [0], [1], [0, 0, 1, 1], [], []>} : vector<144x40xbf16>, vector<40x8xbf16>, vector<144x8xf32> -> vector<144x8xf32>
    %cst_9 = arith.constant 0.000000e+00 : f32
    %8 = vector.broadcast %cst_9 : f32 to vector<144x8xf32>
    %9 = arith.maximumf %7, %8 : vector<144x8xf32>
    %c24 = arith.constant 24 : index
    %c0_10 = arith.constant 0 : index
    %10 = vector.load %arg5[%c24, %c0_10] : memref<336x8xf32, #tpu.memory_space<vmem>>, vector<144x8xf32>
    tpu.vector_store %arg5[%c24, %c0_10], %9 {strides = array<i32>} : memref<336x8xf32, #tpu.memory_space<vmem>>, vector<144x8xf32>,
    %c0_11 = arith.constant 0 : index
    %c144 = arith.constant 144 : index
    %c0_12 = arith.constant 0 : index
    %11 = vector.load %arg1[%c0_11, %c144, %c0_12] : memref<1x288x40xbf16, #tpu.memory_space<vmem>>, vector<1x144x40xbf16>
    %12 = vector.shape_cast %11 : vector<1x144x40xbf16> to vector<144x40xbf16>
    %c0_13 = arith.constant 0 : index
    %c0_14 = arith.constant 0 : index
    %13 = vector.load %arg2[%c0_13, %c0_14] : memref<40x8xbf16, #tpu.memory_space<vmem>>, vector<40x8xbf16>
    %cst_15 = arith.constant dense<0.000000e+00> : vector<144x8xf32>
    %14 = tpu.matmul %12, %13, %cst_15 {dimension_numbers = #tpu.dot_dimension_numbers<[1], [0], [0], [1], [0, 0, 1, 1], [], []>} : vector<144x40xbf16>, vector<40x8xbf16>, vector<144x8xf32> -> vector<144x8xf32>
    %cst_16 = arith.constant 0.000000e+00 : f32
    %15 = vector.broadcast %cst_16 : f32 to vector<144x8xf32>
    %16 = arith.maximumf %14, %15 : vector<144x8xf32>
    %c168 = arith.constant 168 : index
    %c0_17 = arith.constant 0 : index
    %17 = vector.load %arg5[%c168, %c0_17] : memref<336x8xf32, #tpu.memory_space<vmem>>, vector<144x8xf32>
    tpu.vector_store %arg5[%c168, %c0_17], %16 {strides = array<i32>} : memref<336x8xf32, #tpu.memory_space<vmem>>, vector<144x8xf32>,
    %cst_18 = arith.constant 1.000000e+00 : f32
    %18 = vector.broadcast %cst_18 : f32 to vector<144x8xf32>
    %c5 = arith.constant 5 : index
    %c0_19 = arith.constant 0 : index
    %19 = vector.load %arg5[%c5, %c0_19] : memref<336x8xf32, #tpu.memory_space<vmem>>, vector<144x8xf32>
    %c6 = arith.constant 6 : index
    %c0_20 = arith.constant 0 : index
    %20 = vector.load %arg5[%c6, %c0_20] : memref<336x8xf32, #tpu.memory_space<vmem>>, vector<144x8xf32>
    %c7 = arith.constant 7 : index
    %c0_21 = arith.constant 0 : index
    %21 = vector.load %arg5[%c7, %c0_21] : memref<336x8xf32, #tpu.memory_space<vmem>>, vector<144x8xf32>
    %c23 = arith.constant 23 : index
    %c0_22 = arith.constant 0 : index
    %22 = vector.load %arg5[%c23, %c0_22] : memref<336x8xf32, #tpu.memory_space<vmem>>, vector<144x8xf32>
    %c24_23 = arith.constant 24 : index
    %c0_24 = arith.constant 0 : index
    %23 = vector.load %arg5[%c24_23, %c0_24] : memref<336x8xf32, #tpu.memory_space<vmem>>, vector<144x8xf32>
    %c25 = arith.constant 25 : index
    %c0_25 = arith.constant 0 : index
    %24 = vector.load %arg5[%c25, %c0_25] : memref<336x8xf32, #tpu.memory_space<vmem>>, vector<144x8xf32>
    %c41 = arith.constant 41 : index
    %c0_26 = arith.constant 0 : index
    %25 = vector.load %arg5[%c41, %c0_26] : memref<336x8xf32, #tpu.memory_space<vmem>>, vector<144x8xf32>
    %c42 = arith.constant 42 : index
    %c0_27 = arith.constant 0 : index
    %26 = vector.load %arg5[%c42, %c0_27] : memref<336x8xf32, #tpu.memory_space<vmem>>, vector<144x8xf32>
    %c43 = arith.constant 43 : index
    %c0_28 = arith.constant 0 : index
    %27 = vector.load %arg5[%c43, %c0_28] : memref<336x8xf32, #tpu.memory_space<vmem>>, vector<144x8xf32>
    %28 = tpu.concatenate %19, %20, %21, %22, %23, %24, %25, %26, %27, %18 in 1 : vector<144x8xf32>, vector<144x8xf32>, vector<144x8xf32>, vector<144x8xf32>, vector<144x8xf32>, vector<144x8xf32>, vector<144x8xf32>, vector<144x8xf32>, vector<144x8xf32>, vector<144x8xf32> -> vector<144x80xf32>
    %29 = arith.truncf %28 : vector<144x80xf32> to vector<144x80xbf16>
    %c0_29 = arith.constant 0 : index
    %c0_30 = arith.constant 0 : index
    %30 = vector.load %arg3[%c0_29, %c0_30] : memref<80x128xbf16, #tpu.memory_space<vmem>>, vector<80x128xbf16>
    %cst_31 = arith.constant dense<0.000000e+00> : vector<144x128xf32>
    %31 = tpu.matmul %29, %30, %cst_31 {dimension_numbers = #tpu.dot_dimension_numbers<[1], [0], [0], [1], [0, 0, 1, 1], [], []>} : vector<144x80xbf16>, vector<80x128xbf16>, vector<144x128xf32> -> vector<144x128xf32>
    %cst_32 = arith.constant 0.000000e+00 : f32
    %32 = vector.broadcast %cst_32 : f32 to vector<144x128xf32>
    %33 = arith.maximumf %31, %32 : vector<144x128xf32>
    %34 = arith.truncf %33 : vector<144x128xf32> to vector<144x128xbf16>
    %c0_33 = arith.constant 0 : index
    %c0_34 = arith.constant 0 : index
    %c0_35 = arith.constant 0 : index
    %35 = vector.load %arg4[%c0_33, %c0_34, %c0_35] : memref<1x288x128xbf16, #tpu.memory_space<vmem>>, vector<1x144x128xbf16>
    %36 = vector.shape_cast %35 : vector<1x144x128xbf16> to vector<144x128xbf16>
    %37 = vector.shape_cast %34 : vector<144x128xbf16> to vector<1x144x128xbf16>
    tpu.vector_store %arg4[%c0_33, %c0_34, %c0_35], %37 {strides = array<i32>} : memref<1x288x128xbf16, #tpu.memory_space<vmem>>, vector<1x144x128xbf16>,
    %c149 = arith.constant 149 : index
    %c0_36 = arith.constant 0 : index
    %38 = vector.load %arg5[%c149, %c0_36] : memref<336x8xf32, #tpu.memory_space<vmem>>, vector<144x8xf32>
    %c150 = arith.constant 150 : index
    %c0_37 = arith.constant 0 : index
    %39 = vector.load %arg5[%c150, %c0_37] : memref<336x8xf32, #tpu.memory_space<vmem>>, vector<144x8xf32>
    %c151 = arith.constant 151 : index
    %c0_38 = arith.constant 0 : index
    %40 = vector.load %arg5[%c151, %c0_38] : memref<336x8xf32, #tpu.memory_space<vmem>>, vector<144x8xf32>
    %c167 = arith.constant 167 : index
    %c0_39 = arith.constant 0 : index
    %41 = vector.load %arg5[%c167, %c0_39] : memref<336x8xf32, #tpu.memory_space<vmem>>, vector<144x8xf32>
    %c168_40 = arith.constant 168 : index
    %c0_41 = arith.constant 0 : index
    %42 = vector.load %arg5[%c168_40, %c0_41] : memref<336x8xf32, #tpu.memory_space<vmem>>, vector<144x8xf32>
    %c169 = arith.constant 169 : index
    %c0_42 = arith.constant 0 : index
    %43 = vector.load %arg5[%c169, %c0_42] : memref<336x8xf32, #tpu.memory_space<vmem>>, vector<144x8xf32>
    %c185 = arith.constant 185 : index
    %c0_43 = arith.constant 0 : index
    %44 = vector.load %arg5[%c185, %c0_43] : memref<336x8xf32, #tpu.memory_space<vmem>>, vector<144x8xf32>
    %c186 = arith.constant 186 : index
    %c0_44 = arith.constant 0 : index
    %45 = vector.load %arg5[%c186, %c0_44] : memref<336x8xf32, #tpu.memory_space<vmem>>, vector<144x8xf32>
    %c187 = arith.constant 187 : index
    %c0_45 = arith.constant 0 : index
    %46 = vector.load %arg5[%c187, %c0_45] : memref<336x8xf32, #tpu.memory_space<vmem>>, vector<144x8xf32>
    %47 = tpu.concatenate %38, %39, %40, %41, %42, %43, %44, %45, %46, %18 in 1 : vector<144x8xf32>, vector<144x8xf32>, vector<144x8xf32>, vector<144x8xf32>, vector<144x8xf32>, vector<144x8xf32>, vector<144x8xf32>, vector<144x8xf32>, vector<144x8xf32>, vector<144x8xf32> -> vector<144x80xf32>
    %48 = arith.truncf %47 : vector<144x80xf32> to vector<144x80xbf16>
    %c0_46 = arith.constant 0 : index
    %c0_47 = arith.constant 0 : index
    %49 = vector.load %arg3[%c0_46, %c0_47] : memref<80x128xbf16, #tpu.memory_space<vmem>>, vector<80x128xbf16>
    %cst_48 = arith.constant dense<0.000000e+00> : vector<144x128xf32>
    %50 = tpu.matmul %48, %49, %cst_48 {dimension_numbers = #tpu.dot_dimension_numbers<[1], [0], [0], [1], [0, 0, 1, 1], [], []>} : vector<144x80xbf16>, vector<80x128xbf16>, vector<144x128xf32> -> vector<144x128xf32>
    %cst_49 = arith.constant 0.000000e+00 : f32
    %51 = vector.broadcast %cst_49 : f32 to vector<144x128xf32>
    %52 = arith.maximumf %50, %51 : vector<144x128xf32>
    %53 = arith.truncf %52 : vector<144x128xf32> to vector<144x128xbf16>
    %c0_50 = arith.constant 0 : index
    %c144_51 = arith.constant 144 : index
    %c0_52 = arith.constant 0 : index
    %54 = vector.load %arg4[%c0_50, %c144_51, %c0_52] : memref<1x288x128xbf16, #tpu.memory_space<vmem>>, vector<1x144x128xbf16>
    %55 = vector.shape_cast %54 : vector<1x144x128xbf16> to vector<144x128xbf16>
    %56 = vector.shape_cast %53 : vector<144x128xbf16> to vector<1x144x128xbf16>
    tpu.vector_store %arg4[%c0_50, %c144_51, %c0_52], %56 {strides = array<i32>} : memref<1x288x128xbf16, #tpu.memory_space<vmem>>, vector<1x144x128xbf16>,
    return
  }
  func.func @transform_0(%arg0: i32) -> (i32, i32, i32) {
    %c0_i32 = arith.constant 0 : i32
    %c0_i32_0 = arith.constant 0 : i32
    %c0_i32_1 = arith.constant 0 : i32
    return %arg0, %c0_i32, %c0_i32_0 : i32, i32, i32
  }
  func.func @transform_1(%arg0: i32) -> (i32, i32) {
    %c0_i32 = arith.constant 0 : i32
    %c0_i32_0 = arith.constant 0 : i32
    %c0_i32_1 = arith.constant 0 : i32
    return %c0_i32, %c0_i32_0 : i32, i32
  }
  func.func @transform_2(%arg0: i32) -> (i32, i32) {
    %c0_i32 = arith.constant 0 : i32
    %c0_i32_0 = arith.constant 0 : i32
    %c0_i32_1 = arith.constant 0 : i32
    return %c0_i32, %c0_i32_0 : i32, i32
  }
  func.func @transform_3(%arg0: i32) -> (i32, i32, i32) {
    %c0_i32 = arith.constant 0 : i32
    %c0_i32_0 = arith.constant 0 : i32
    %c0_i32_1 = arith.constant 0 : i32
    return %arg0, %c0_i32, %c0_i32_0 : i32, i32, i32
  }
}

</mosaic_0001>

<llo_original>
// kernel: _cnn_forward.1
$region0: #{_cnn_forward.1}
  #allocation0 [shape = 'u32[]', space=smem, size = 0x4, offset = 0x4, fixed_abs, tag = 'smem constant byte address 0x4 - core index']
  #allocation1 [shape = 'u32[72,128]{1,0:T(1,128)}', space=vmem, size = 0x9000, scoped, tag = 'internal scratch']
  #allocation2 [shape = 'f32[336,8]{1,0:T(8,128)}', space=vmem, size = 0x2a000, scoped, tag = 'scratch operand']
  %s0 = inlined_call_operand.vmem [shape: bf16[2,288,40], index: 0, kind: input, shape index: {}]
  %s1 = inlined_call_operand.vmem [shape: bf16[40,8], index: 1, kind: input, shape index: {}]
  %s2 = inlined_call_operand.vmem [shape: bf16[80,128], index: 2, kind: input, shape index: {}]
  %s3 = inlined_call_operand.vmem [shape: bf16[2,288,128], index: 3, kind: output, shape index: {}]
  %s4 = sld [smem:[#allocation0]]
  $region45: #{_cnn_forward.1} parent=0
    _
  %s6 = ssub.s32 1, %s4
  %s7 = scalar_select 0, %s6, %s4
  loop: start=0, step=1, limit=4
  $region2: #{_cnn_forward.1} parent=0 // loop_pre_header
    _
  $region3: #{_cnn_forward.1} parent=0 // loop_header
    %s9 = sphi 0, %s13
    %p10 = scmp.ge.s32.totalorder %s9, 4
    %s19 = sphi 0, %s21
    %s22 = sphi 0, %s19
    %s23 = sphi 0, %s22
    %s39 = sphi 0, %s23
    %s43 = sphi 0, %s43
    %s45 = sphi 0, %s43
    %s46 = sphi 0, %s45
    %s60 = sphi 0, %s46
    %s64 = sphi 0, %s64
    %s66 = sphi 0, %s64
    %s67 = sphi 0, %s66
    %s81 = sphi 0, %s67
    %s87 = sphi 0, %s89
    %s90 = sphi 0, %s87
    %s91 = sphi 0, %s90
    %s107 = sphi 0, %s91
  $region4: #{_cnn_forward.1} parent=0 // loop_header_branch
    %12 = sbr.rel (%p10) target = $region8
  $region5: #{_cnn_forward.1} parent=0 // loop_body
    %s14 = ssub.s32 %s9, 1
    %s15 = ssub.s32 %s9, 2
    %s16 = sadd.s32 %s9, 1
    %s17 = ssub.s32 %s9, %s16
    %p18 = scmp.eq.s32.totalorder %s17, 0
    %s20 = sadd.s32 %s19, 1
    %s21 = scalar_select %p18, %s19, %s20
    %p24 = pneg %p18
    %p25 = scmp.eq.s32.totalorder %s9, 1
    %p26 = por %p24, %p25
    %p27 = scmp.ne.s32.totalorder %s19, %s22
    %p28 = scmp.eq.s32.totalorder %s9, 0
    %p29 = por %p27, %p28
    %p30 = scmp.ne.s32.totalorder %s19, %s22
    %p31 = scmp.eq.s32.totalorder %s14, 1
    %p32 = por %p30, %p31
    %p33 = scmp.ne.s32.totalorder %s22, %s23
    %p34 = scmp.eq.s32.totalorder %s14, 0
    %p35 = por %p33, %p34
    %p36 = scmp.ne.s32.totalorder %s22, %s23
    %p37 = scmp.eq.s32.totalorder %s15, 1
    %p38 = por %p36, %p37
    %p40 = scmp.ne.s32.totalorder %s23, %s39
    %p41 = scmp.eq.s32.totalorder %s15, 0
    %p42 = por %p40, %p41
    %s44 = sadd.s32 %s43, 1
    %p47 = scmp.eq.s32.totalorder %s9, 1
    %p48 = scmp.ne.s32.totalorder %s43, %s45
    %p49 = scmp.eq.s32.totalorder %s9, 0
    %p50 = por %p48, %p49
    %p51 = scmp.ne.s32.totalorder %s43, %s45
    %p52 = scmp.eq.s32.totalorder %s14, 1
    %p53 = por %p51, %p52
    %p54 = scmp.ne.s32.totalorder %s45, %s46
    %p55 = scmp.eq.s32.totalorder %s14, 0
    %p56 = por %p54, %p55
    %p57 = scmp.ne.s32.totalorder %s45, %s46
    %p58 = scmp.eq.s32.totalorder %s15, 1
    %p59 = por %p57, %p58
    %p61 = scmp.ne.s32.totalorder %s46, %s60
    %p62 = scmp.eq.s32.totalorder %s15, 0
    %p63 = por %p61, %p62
    %s65 = sadd.s32 %s64, 1
    %p68 = scmp.eq.s32.totalorder %s9, 1
    %p69 = scmp.ne.s32.totalorder %s64, %s66
    %p70 = scmp.eq.s32.totalorder %s9, 0
    %p71 = por %p69, %p70
    %p72 = scmp.ne.s32.totalorder %s64, %s66
    %p73 = scmp.eq.s32.totalorder %s14, 1
    %p74 = por %p72, %p73
    %p75 = scmp.ne.s32.totalorder %s66, %s67
    %p76 = scmp.eq.s32.totalorder %s14, 0
    %p77 = por %p75, %p76
    %p78 = scmp.ne.s32.totalorder %s66, %s67
    %p79 = scmp.eq.s32.totalorder %s15, 1
    %p80 = por %p78, %p79
    %p82 = scmp.ne.s32.totalorder %s67, %s81
    %p83 = scmp.eq.s32.totalorder %s15, 0
    %p84 = por %p82, %p83
    %s85 = ssub.s32 %s9, %s16
    %p86 = scmp.eq.s32.totalorder %s85, 0
    %s88 = sadd.s32 %s87, 1
    %s89 = scalar_select %p86, %s87, %s88
    %p92 = pneg %p86
    %p93 = scmp.eq.s32.totalorder %s9, 1
    %p94 = por %p92, %p93
    %p95 = scmp.ne.s32.totalorder %s87, %s90
    %p96 = scmp.eq.s32.totalorder %s9, 0
    %p97 = por %p95, %p96
    %p98 = scmp.ne.s32.totalorder %s87, %s90
    %p99 = scmp.eq.s32.totalorder %s14, 1
    %p100 = por %p98, %p99
    %p101 = scmp.ne.s32.totalorder %s90, %s91
    %p102 = scmp.eq.s32.totalorder %s14, 0
    %p103 = por %p101, %p102
    %p104 = scmp.ne.s32.totalorder %s90, %s91
    %p105 = scmp.eq.s32.totalorder %s15, 1
    %p106 = por %p104, %p105
    %p108 = scmp.ne.s32.totalorder %s91, %s107
    %p109 = scmp.eq.s32.totalorder %s15, 0
    %p110 = por %p108, %p109
    %p111 = scmp.le.s32.totalorder 1, %s9
    %p112 = scmp.lt.s32.totalorder %s9, 3
    %p113 = pnand %p111, %p112
    %p114 = pneg %p113
    // Predicated region
    $region9: #{_cnn_forward.1} parent=5 // pred_check
      _
    $region10: #{_cnn_forward.1} parent=5 // pred_check_branch
      %116 = sbr.rel (%p113) target = $region12
    $region11: #{_cnn_forward.1} parent=5 // pred_region
      %s117 = ssub.s32 %s9, 1
      // Predicated region
      $region13: #{_cnn_forward.1} parent=11 // pred_check
        %p118 = pneg %p56
      $region14: #{_cnn_forward.1} parent=11 // pred_check_branch
        %120 = sbr.rel (%p118) target = $region16
      $region15: #{_cnn_forward.1} parent=11 // pred_region
        _
      $region16: #{_cnn_forward.1} parent=11 // pred_fallthru
        _
      // Predicated region
      $region17: #{_cnn_forward.1} parent=11 // pred_check
        %p121 = pneg %p77
      $region18: #{_cnn_forward.1} parent=11 // pred_check_branch
        %123 = sbr.rel (%p121) target = $region20
      $region19: #{_cnn_forward.1} parent=11 // pred_region
        _
      $region20: #{_cnn_forward.1} parent=11 // pred_fallthru
        _
    $region12: #{_cnn_forward.1} parent=5 // pred_fallthru
      _
    %p124 = scmp.lt.s32.totalorder %s9, 2
    // Predicated region
    $region21: #{_cnn_forward.1} parent=5 // pred_check
      %p125 = pneg %p124
    $region22: #{_cnn_forward.1} parent=5 // pred_check_branch
      %127 = sbr.rel (%p125) target = $region24
    $region23: #{_cnn_forward.1} parent=5 // pred_region
      // Predicated region
      $region25: #{_cnn_forward.1} parent=23 // pred_check
        %p128 = pneg %p29
      $region26: #{_cnn_forward.1} parent=23 // pred_check_branch
        %130 = sbr.rel (%p128) target = $region28
      $region27: #{_cnn_forward.1} parent=23 // pred_region
        %p131 = scmp.lt.s32.totalorder %s9, 1
        %s132 = scalar_select %p131, %s9, 1
        %s133 = smul.addr %s132, 36
        %s134 = smul.addr %s133, 4
        %s135 = scalar_lea.vmem %s0, %s134
      $region28: #{_cnn_forward.1} parent=23 // pred_fallthru
        _
    $region24: #{_cnn_forward.1} parent=5 // pred_fallthru
      _
    %p136 = scmp.le.s32.totalorder 1, %s9
    %p137 = scmp.lt.s32.totalorder %s9, 3
    %p138 = pnand %p136, %p137
    %p139 = pneg %p138
    // Predicated region
    $region29: #{_cnn_forward.1} parent=5 // pred_check
      _
    $region30: #{_cnn_forward.1} parent=5 // pred_check_branch
      %141 = sbr.rel (%p138) target = $region32
    $region31: #{_cnn_forward.1} parent=5 // pred_region
      %s142 = ssub.s32 %s9, 1
      %p143 = scmp.lt.s32.totalorder %s14, 1
      %s144 = scalar_select %p143, %s14, 1
      %s145 = smul.addr %s144, 36
      %s146 = smul.addr %s145, 4
      %s147 = scalar_lea.vmem %s0, %s146
      %p148 = pneg %p35
      %p149 = pneg %p32
      %p150 = pneg %p56
      %p151 = pneg %p53
      %p152 = pneg %p77
      %p153 = pneg %p74
      %p154 = pneg %p103
      %p155 = pneg %p100
      %p156 = scmp.lt.s32.totalorder %s14, 1
      %s157 = scalar_select %p156, %s14, 1
      %s158 = smul.addr %s157, 36
      %s159 = smul.addr %s158, 4
      %s160 = scalar_lea.vmem %s3, %s159
      %p161 = scmp.lt.s32.totalorder %s14, 1
      %s162 = scalar_select %p161, %s14, 1
      %s163 = smul.addr %s162, 36
      %s164 = smul.addr %s163, 4
      %s165 = scalar_lea.vmem %s0, %s164
      %p166 = scmp.lt.s32.totalorder %s14, 1
      %s167 = scalar_select %p166, %s14, 1
      %s168 = smul.addr %s167, 36
      %s169 = smul.addr %s168, 4
      %s170 = scalar_lea.vmem %s3, %s169
      %vm172 = vcmask 64512
      %173 = vst.msk [vmem:[#allocation2] sm:$0xff] %vm172, 0.0
      %174 = vst.msk [vmem:[#allocation2 + $0x8] sm:$0xff] %vm172, 0.0
      %175 = vst.msk [vmem:[#allocation2 + $0x10] sm:$0xff] %vm172, 0.0
      %176 = vst.msk [vmem:[#allocation2 + $0x138] sm:$0xff] %vm172, 0.0
      %177 = vst.msk [vmem:[#allocation2 + $0x140] sm:$0xff] %vm172, 0.0
      %178 = vst.msk [vmem:[#allocation2 + $0x148] sm:$0xff] %vm172, 0.0
      %v179 = vld [vmem:[%s165] sm:$0xf]
      %v180 = vld [vmem:[%s165 + $0x4] sm:$0xf]
      %v181 = vld [vmem:[%s165 + $0x8] sm:$0xf]
      %v182 = vld [vmem:[%s165 + $0xc] sm:$0xf]
      %v183 = vld [vmem:[%s165 + $0x10] sm:$0xf]
      %v184 = vld [vmem:[%s165 + $0x14] sm:$0xf]
      %v185 = vld [vmem:[%s165 + $0x18] sm:$0xf]
      %v186 = vld [vmem:[%s165 + $0x1c] sm:$0xf]
      %v187 = vld [vmem:[%s165 + $0x20] sm:$0xf]
      %v188 = vld [vmem:[%s165 + $0x24] sm:$0xf]
      %v189 = vld [vmem:[%s165 + $0x28] sm:$0xf]
      %v190 = vld [vmem:[%s165 + $0x2c] sm:$0xf]
      %v191 = vld [vmem:[%s165 + $0x30] sm:$0xf]
      %v192 = vld [vmem:[%s165 + $0x34] sm:$0xf]
      %v193 = vld [vmem:[%s165 + $0x38] sm:$0xf]
      %v194 = vld [vmem:[%s165 + $0x3c] sm:$0xf]
      %v195 = vld [vmem:[%s165 + $0x40] sm:$0xf]
      %v196 = vld [vmem:[%s165 + $0x44] sm:$0xf]
      %v197 = vld [vmem:[%s1] sm:$0xf]
      %v198 = vld [vmem:[%s1 + $0x4] sm:$0xf]
      %v199 = vld [vmem:[%s1 + $0x8] sm:$0xf]
      %v200 = vld [vmem:[%s1 + $0xc] sm:$0xf]
      %v201 = vld [vmem:[%s1 + $0x10] sm:$0xf]
      %v220 = vunpack.c.l.b16 %v179
      %v221 = vunpack.c.l.b16 %v180
      %v222 = vunpack.c.l.b16 %v181
      %v223 = vunpack.c.l.b16 %v182
      %v224 = vunpack.c.l.b16 %v183
      %v225 = vunpack.c.l.b16 %v184
      %v226 = vunpack.c.l.b16 %v185
      %v227 = vunpack.c.l.b16 %v186
      %v228 = vunpack.c.l.b16 %v187
      %v229 = vunpack.c.l.b16 %v188
      %v230 = vunpack.c.l.b16 %v189
      %v231 = vunpack.c.l.b16 %v190
      %v232 = vunpack.c.l.b16 %v191
      %v233 = vunpack.c.l.b16 %v192
      %v234 = vunpack.c.l.b16 %v193
      %v235 = vunpack.c.l.b16 %v194
      %v236 = vunpack.c.l.b16 %v195
      %v237 = vunpack.c.l.b16 %v196
      %v238 = vpack.c.b16 %v221, %v220
      %v239 = vpack.c.b16 %v223, %v222
      %v240 = vpack.c.b16 %v225, %v224
      %v241 = vpack.c.b16 %v227, %v226
      %v242 = vpack.c.b16 %v229, %v228
      %v243 = vpack.c.b16 %v231, %v230
      %v244 = vpack.c.b16 %v233, %v232
      %v245 = vpack.c.b16 %v235, %v234
      %v246 = vpack.c.b16 %v237, %v236
      %v252 = vunpack.c.l.b16 %v197
      %v253 = vunpack.c.l.b16 %v198
      %v254 = vunpack.c.l.b16 %v199
      %v255 = vunpack.c.l.b16 %v200
      %v256 = vunpack.c.l.b16 %v201
      %v257 = vpack.c.b16 %v253, %v252
      %v258 = vpack.c.b16 %v255, %v254
      %v259 = vpack.c.b16 %v256, %v256
      %vm262 = vcmask 326656
      %v264 = vsel %vm262, %v238, 0
      %v267 = vsel %vm262, %v239, 0
      %v270 = vsel %vm262, %v240, 0
      %v273 = vsel %vm262, %v241, 0
      %v276 = vsel %vm262, %v242, 0
      %v279 = vsel %vm262, %v243, 0
      %v282 = vsel %vm262, %v244, 0
      %v285 = vsel %vm262, %v245, 0
      %v288 = vsel %vm262, %v246, 0
      %vm290 = vcmask 1043456
      %v292 = vsel %vm290, %v259, 0
      %294 = vmatpush.bf16.msra.mxu0 0
      %295 = vmatpush.bf16.msra.mxu0 0
      %296 = vmatpush.bf16.msra.mxu0 0
      %297 = vmatpush.bf16.msra.mxu0 0
      %298 = vmatpush.bf16.msra.mxu0 0
      %299 = vmatpush.bf16.msra.mxu0 %v292
      %300 = vmatpush.bf16.msra.mxu0 %v258
      %301 = vmatpush.bf16.msra.mxu0 %v257
      %302 = vmatmul.bf16.gmra.mxu0 %v264
      %v303 = vpop.f32.mrf.mxu0
      %v304 = vadd.f32 0.0, %v303
      %v305 = vpop.f32.mrf.mxu0
      %v306 = vadd.f32 0.0, %v305
      %307 = vmatmul.bf16.gmra.mxu0 %v267
      %v308 = vpop.f32.mrf.mxu0
      %v309 = vadd.f32 0.0, %v308
      %v310 = vpop.f32.mrf.mxu0
      %v311 = vadd.f32 0.0, %v310
      %312 = vmatmul.bf16.gmra.mxu0 %v270
      %v313 = vpop.f32.mrf.mxu0
      %v314 = vadd.f32 0.0, %v313
      %v315 = vpop.f32.mrf.mxu0
      %v316 = vadd.f32 0.0, %v315
      %317 = vmatmul.bf16.gmra.mxu0 %v273
      %v318 = vpop.f32.mrf.mxu0
      %v319 = vadd.f32 0.0, %v318
      %v320 = vpop.f32.mrf.mxu0
      %v321 = vadd.f32 0.0, %v320
      %322 = vmatmul.bf16.gmra.mxu0 %v276
      %v323 = vpop.f32.mrf.mxu0
      %v324 = vadd.f32 0.0, %v323
      %v325 = vpop.f32.mrf.mxu0
      %v326 = vadd.f32 0.0, %v325
      %327 = vmatmul.bf16.gmra.mxu0 %v279
      %v328 = vpop.f32.mrf.mxu0
      %v329 = vadd.f32 0.0, %v328
      %v330 = vpop.f32.mrf.mxu0
      %v331 = vadd.f32 0.0, %v330
      %332 = vmatmul.bf16.gmra.mxu0 %v282
      %v333 = vpop.f32.mrf.mxu0
      %v334 = vadd.f32 0.0, %v333
      %v335 = vpop.f32.mrf.mxu0
      %v336 = vadd.f32 0.0, %v335
      %337 = vmatmul.bf16.gmra.mxu0 %v285
      %v338 = vpop.f32.mrf.mxu0
      %v339 = vadd.f32 0.0, %v338
      %v340 = vpop.f32.mrf.mxu0
      %v341 = vadd.f32 0.0, %v340
      %342 = vmatmul.bf16.gmra.mxu0 %v288
      %v343 = vpop.f32.mrf.mxu0
      %v344 = vadd.f32 0.0, %v343
      %v345 = vpop.f32.mrf.mxu0
      %v346 = vadd.f32 0.0, %v345
      %347 = vdwg.mxu0
      %v348 = vmax.f32 %v304, 0.0
      %v349 = vmax.f32 %v306, 0.0
      %v350 = vmax.f32 %v309, 0.0
      %v351 = vmax.f32 %v311, 0.0
      %v352 = vmax.f32 %v314, 0.0
      %v353 = vmax.f32 %v316, 0.0
      %v354 = vmax.f32 %v319, 0.0
      %v355 = vmax.f32 %v321, 0.0
      %v356 = vmax.f32 %v324, 0.0
      %v357 = vmax.f32 %v326, 0.0
      %v358 = vmax.f32 %v329, 0.0
      %v359 = vmax.f32 %v331, 0.0
      %v360 = vmax.f32 %v334, 0.0
      %v361 = vmax.f32 %v336, 0.0
      %v362 = vmax.f32 %v339, 0.0
      %v363 = vmax.f32 %v341, 0.0
      %v364 = vmax.f32 %v344, 0.0
      %v365 = vmax.f32 %v346, 0.0
      %366 = vst.msk [vmem:[#allocation2 + $0x18] sm:$0xff] %vm172, %v348
      %367 = vst.msk [vmem:[#allocation2 + $0x20] sm:$0xff] %vm172, %v349
      %368 = vst.msk [vmem:[#allocation2 + $0x28] sm:$0xff] %vm172, %v350
      %369 = vst.msk [vmem:[#allocation2 + $0x30] sm:$0xff] %vm172, %v351
      %370 = vst.msk [vmem:[#allocation2 + $0x38] sm:$0xff] %vm172, %v352
      %371 = vst.msk [vmem:[#allocation2 + $0x40] sm:$0xff] %vm172, %v353
      %372 = vst.msk [vmem:[#allocation2 + $0x48] sm:$0xff] %vm172, %v354
      %373 = vst.msk [vmem:[#allocation2 + $0x50] sm:$0xff] %vm172, %v355
      %374 = vst.msk [vmem:[#allocation2 + $0x58] sm:$0xff] %vm172, %v356
      %375 = vst.msk [vmem:[#allocation2 + $0x60] sm:$0xff] %vm172, %v357
      %376 = vst.msk [vmem:[#allocation2 + $0x68] sm:$0xff] %vm172, %v358
      %377 = vst.msk [vmem:[#allocation2 + $0x70] sm:$0xff] %vm172, %v359
      %378 = vst.msk [vmem:[#allocation2 + $0x78] sm:$0xff] %vm172, %v360
      %379 = vst.msk [vmem:[#allocation2 + $0x80] sm:$0xff] %vm172, %v361
      %380 = vst.msk [vmem:[#allocation2 + $0x88] sm:$0xff] %vm172, %v362
      %381 = vst.msk [vmem:[#allocation2 + $0x90] sm:$0xff] %vm172, %v363
      %382 = vst.msk [vmem:[#allocation2 + $0x98] sm:$0xff] %vm172, %v364
      %383 = vst.msk [vmem:[#allocation2 + $0xa0] sm:$0xff] %vm172, %v365
      %v384 = vld [vmem:[%s165 + $0x48] sm:$0xf]
      %v385 = vld [vmem:[%s165 + $0x4c] sm:$0xf]
      %v386 = vld [vmem:[%s165 + $0x50] sm:$0xf]
      %v387 = vld [vmem:[%s165 + $0x54] sm:$0xf]
      %v388 = vld [vmem:[%s165 + $0x58] sm:$0xf]
      %v389 = vld [vmem:[%s165 + $0x5c] sm:$0xf]
      %v390 = vld [vmem:[%s165 + $0x60] sm:$0xf]
      %v391 = vld [vmem:[%s165 + $0x64] sm:$0xf]
      %v392 = vld [vmem:[%s165 + $0x68] sm:$0xf]
      %v393 = vld [vmem:[%s165 + $0x6c] sm:$0xf]
      %v394 = vld [vmem:[%s165 + $0x70] sm:$0xf]
      %v395 = vld [vmem:[%s165 + $0x74] sm:$0xf]
      %v396 = vld [vmem:[%s165 + $0x78] sm:$0xf]
      %v397 = vld [vmem:[%s165 + $0x7c] sm:$0xf]
      %v398 = vld [vmem:[%s165 + $0x80] sm:$0xf]
      %v399 = vld [vmem:[%s165 + $0x84] sm:$0xf]
      %v400 = vld [vmem:[%s165 + $0x88] sm:$0xf]
      %v401 = vld [vmem:[%s165 + $0x8c] sm:$0xf]
      %v402 = vld [vmem:[%s1] sm:$0xf]
      %v403 = vld [vmem:[%s1 + $0x4] sm:$0xf]
      %v404 = vld [vmem:[%s1 + $0x8] sm:$0xf]
      %v405 = vld [vmem:[%s1 + $0xc] sm:$0xf]
      %v406 = vld [vmem:[%s1 + $0x10] sm:$0xf]
      %v425 = vunpack.c.l.b16 %v384
      %v426 = vunpack.c.l.b16 %v385
      %v427 = vunpack.c.l.b16 %v386
      %v428 = vunpack.c.l.b16 %v387
      %v429 = vunpack.c.l.b16 %v388
      %v430 = vunpack.c.l.b16 %v389
      %v431 = vunpack.c.l.b16 %v390
      %v432 = vunpack.c.l.b16 %v391
      %v433 = vunpack.c.l.b16 %v392
      %v434 = vunpack.c.l.b16 %v393
      %v435 = vunpack.c.l.b16 %v394
      %v436 = vunpack.c.l.b16 %v395
      %v437 = vunpack.c.l.b16 %v396
      %v438 = vunpack.c.l.b16 %v397
      %v439 = vunpack.c.l.b16 %v398
      %v440 = vunpack.c.l.b16 %v399
      %v441 = vunpack.c.l.b16 %v400
      %v442 = vunpack.c.l.b16 %v401
      %v443 = vpack.c.b16 %v426, %v425
      %v444 = vpack.c.b16 %v428, %v427
      %v445 = vpack.c.b16 %v430, %v429
      %v446 = vpack.c.b16 %v432, %v431
      %v447 = vpack.c.b16 %v434, %v433
      %v448 = vpack.c.b16 %v436, %v435
      %v449 = vpack.c.b16 %v438, %v437
      %v450 = vpack.c.b16 %v440, %v439
      %v451 = vpack.c.b16 %v442, %v441
      %v457 = vunpack.c.l.b16 %v402
      %v458 = vunpack.c.l.b16 %v403
      %v459 = vunpack.c.l.b16 %v404
      %v460 = vunpack.c.l.b16 %v405
      %v461 = vunpack.c.l.b16 %v406
      %v462 = vpack.c.b16 %v458, %v457
      %v463 = vpack.c.b16 %v460, %v459
      %v464 = vpack.c.b16 %v461, %v461
      %v468 = vsel %vm262, %v443, 0
      %v471 = vsel %vm262, %v444, 0
      %v474 = vsel %vm262, %v445, 0
      %v477 = vsel %vm262, %v446, 0
      %v480 = vsel %vm262, %v447, 0
      %v483 = vsel %vm262, %v448, 0
      %v486 = vsel %vm262, %v449, 0
      %v489 = vsel %vm262, %v450, 0
      %v492 = vsel %vm262, %v451, 0
      %v495 = vsel %vm290, %v464, 0
      %497 = vmatpush.bf16.msra.mxu0 0
      %498 = vmatpush.bf16.msra.mxu0 0
      %499 = vmatpush.bf16.msra.mxu0 0
      %500 = vmatpush.bf16.msra.mxu0 0
      %501 = vmatpush.bf16.msra.mxu0 0
      %502 = vmatpush.bf16.msra.mxu0 %v495
      %503 = vmatpush.bf16.msra.mxu0 %v463
      %504 = vmatpush.bf16.msra.mxu0 %v462
      %505 = vmatmul.bf16.gmra.mxu0 %v468
      %v506 = vpop.f32.mrf.mxu0
      %v507 = vadd.f32 0.0, %v506
      %v508 = vpop.f32.mrf.mxu0
      %v509 = vadd.f32 0.0, %v508
      %510 = vmatmul.bf16.gmra.mxu0 %v471
      %v511 = vpop.f32.mrf.mxu0
      %v512 = vadd.f32 0.0, %v511
      %v513 = vpop.f32.mrf.mxu0
      %v514 = vadd.f32 0.0, %v513
      %515 = vmatmul.bf16.gmra.mxu0 %v474
      %v516 = vpop.f32.mrf.mxu0
      %v517 = vadd.f32 0.0, %v516
      %v518 = vpop.f32.mrf.mxu0
      %v519 = vadd.f32 0.0, %v518
      %520 = vmatmul.bf16.gmra.mxu0 %v477
      %v521 = vpop.f32.mrf.mxu0
      %v522 = vadd.f32 0.0, %v521
      %v523 = vpop.f32.mrf.mxu0
      %v524 = vadd.f32 0.0, %v523
      %525 = vmatmul.bf16.gmra.mxu0 %v480
      %v526 = vpop.f32.mrf.mxu0
      %v527 = vadd.f32 0.0, %v526
      %v528 = vpop.f32.mrf.mxu0
      %v529 = vadd.f32 0.0, %v528
      %530 = vmatmul.bf16.gmra.mxu0 %v483
      %v531 = vpop.f32.mrf.mxu0
      %v532 = vadd.f32 0.0, %v531
      %v533 = vpop.f32.mrf.mxu0
      %v534 = vadd.f32 0.0, %v533
      %535 = vmatmul.bf16.gmra.mxu0 %v486
      %v536 = vpop.f32.mrf.mxu0
      %v537 = vadd.f32 0.0, %v536
      %v538 = vpop.f32.mrf.mxu0
      %v539 = vadd.f32 0.0, %v538
      %540 = vmatmul.bf16.gmra.mxu0 %v489
      %v541 = vpop.f32.mrf.mxu0
      %v542 = vadd.f32 0.0, %v541
      %v543 = vpop.f32.mrf.mxu0
      %v544 = vadd.f32 0.0, %v543
      %545 = vmatmul.bf16.gmra.mxu0 %v492
      %v546 = vpop.f32.mrf.mxu0
      %v547 = vadd.f32 0.0, %v546
      %v548 = vpop.f32.mrf.mxu0
      %v549 = vadd.f32 0.0, %v548
      %550 = vdwg.mxu0
      %v551 = vmax.f32 %v507, 0.0
      %v552 = vmax.f32 %v509, 0.0
      %v553 = vmax.f32 %v512, 0.0
      %v554 = vmax.f32 %v514, 0.0
      %v555 = vmax.f32 %v517, 0.0
      %v556 = vmax.f32 %v519, 0.0
      %v557 = vmax.f32 %v522, 0.0
      %v558 = vmax.f32 %v524, 0.0
      %v559 = vmax.f32 %v527, 0.0
      %v560 = vmax.f32 %v529, 0.0
      %v561 = vmax.f32 %v532, 0.0
      %v562 = vmax.f32 %v534, 0.0
      %v563 = vmax.f32 %v537, 0.0
      %v564 = vmax.f32 %v539, 0.0
      %v565 = vmax.f32 %v542, 0.0
      %v566 = vmax.f32 %v544, 0.0
      %v567 = vmax.f32 %v547, 0.0
      %v568 = vmax.f32 %v549, 0.0
      %569 = vst.msk [vmem:[#allocation2 + $0xa8] sm:$0xff] %vm172, %v551
      %570 = vst.msk [vmem:[#allocation2 + $0xb0] sm:$0xff] %vm172, %v552
      %571 = vst.msk [vmem:[#allocation2 + $0xb8] sm:$0xff] %vm172, %v553
      %572 = vst.msk [vmem:[#allocation2 + $0xc0] sm:$0xff] %vm172, %v554
      %573 = vst.msk [vmem:[#allocation2 + $0xc8] sm:$0xff] %vm172, %v555
      %574 = vst.msk [vmem:[#allocation2 + $0xd0] sm:$0xff] %vm172, %v556
      %575 = vst.msk [vmem:[#allocation2 + $0xd8] sm:$0xff] %vm172, %v557
      %576 = vst.msk [vmem:[#allocation2 + $0xe0] sm:$0xff] %vm172, %v558
      %577 = vst.msk [vmem:[#allocation2 + $0xe8] sm:$0xff] %vm172, %v559
      %578 = vst.msk [vmem:[#allocation2 + $0xf0] sm:$0xff] %vm172, %v560
      %579 = vst.msk [vmem:[#allocation2 + $0xf8] sm:$0xff] %vm172, %v561
      %580 = vst.msk [vmem:[#allocation2 + $0x100] sm:$0xff] %vm172, %v562
      %581 = vst.msk [vmem:[#allocation2 + $0x108] sm:$0xff] %vm172, %v563
      %582 = vst.msk [vmem:[#allocation2 + $0x110] sm:$0xff] %vm172, %v564
      %583 = vst.msk [vmem:[#allocation2 + $0x118] sm:$0xff] %vm172, %v565
      %584 = vst.msk [vmem:[#allocation2 + $0x120] sm:$0xff] %vm172, %v566
      %585 = vst.msk [vmem:[#allocation2 + $0x128] sm:$0xff] %vm172, %v567
      %586 = vst.msk [vmem:[#allocation2 + $0x130] sm:$0xff] %vm172, %v568
      %v587 = vld [vmem:[#allocation2 + $0x5] sm:$0xff]
      %v588 = vld [vmem:[#allocation2 + $0xd] sm:$0xff]
      %v589 = vld [vmem:[#allocation2 + $0x15] sm:$0xff]
      %v590 = vld [vmem:[#allocation2 + $0x1d] sm:$0xff]
      %v591 = vld [vmem:[#allocation2 + $0x25] sm:$0xff]
      %v592 = vld [vmem:[#allocation2 + $0x2d] sm:$0xff]
      %v593 = vld [vmem:[#allocation2 + $0x35] sm:$0xff]
      %v594 = vld [vmem:[#allocation2 + $0x3d] sm:$0xff]
      %v595 = vld [vmem:[#allocation2 + $0x45] sm:$0xff]
      %v596 = vld [vmem:[#allocation2 + $0x4d] sm:$0xff]
      %v597 = vld [vmem:[#allocation2 + $0x55] sm:$0xff]
      %v598 = vld [vmem:[#allocation2 + $0x5d] sm:$0xff]
      %v599 = vld [vmem:[#allocation2 + $0x65] sm:$0xff]
      %v600 = vld [vmem:[#allocation2 + $0x6d] sm:$0xff]
      %v601 = vld [vmem:[#allocation2 + $0x75] sm:$0xff]
      %v602 = vld [vmem:[#allocation2 + $0x7d] sm:$0xff]
      %v603 = vld [vmem:[#allocation2 + $0x85] sm:$0xff]
      %v604 = vld [vmem:[#allocation2 + $0x8d] sm:$0xff]
      %v605 = vld [vmem:[#allocation2 + $0x6] sm:$0xff]
      %v606 = vld [vmem:[#allocation2 + $0xe] sm:$0xff]
      %v607 = vld [vmem:[#allocation2 + $0x16] sm:$0xff]
      %v608 = vld [vmem:[#allocation2 + $0x1e] sm:$0xff]
      %v609 = vld [vmem:[#allocation2 + $0x26] sm:$0xff]
      %v610 = vld [vmem:[#allocation2 + $0x2e] sm:$0xff]
      %v611 = vld [vmem:[#allocation2 + $0x36] sm:$0xff]
      %v612 = vld [vmem:[#allocation2 + $0x3e] sm:$0xff]
      %v613 = vld [vmem:[#allocation2 + $0x46] sm:$0xff]
      %v614 = vld [vmem:[#allocation2 + $0x4e] sm:$0xff]
      %v615 = vld [vmem:[#allocation2 + $0x56] sm:$0xff]
      %v616 = vld [vmem:[#allocation2 + $0x5e] sm:$0xff]
      %v617 = vld [vmem:[#allocation2 + $0x66] sm:$0xff]
      %v618 = vld [vmem:[#allocation2 + $0x6e] sm:$0xff]
      %v619 = vld [vmem:[#allocation2 + $0x76] sm:$0xff]
      %v620 = vld [vmem:[#allocation2 + $0x7e] sm:$0xff]
      %v621 = vld [vmem:[#allocation2 + $0x86] sm:$0xff]
      %v622 = vld [vmem:[#allocation2 + $0x8e] sm:$0xff]
      %v623 = vld [vmem:[#allocation2 + $0x7] sm:$0xff]
      %v624 = vld [vmem:[#allocation2 + $0xf] sm:$0xff]
      %v625 = vld [vmem:[#allocation2 + $0x17] sm:$0xff]
      %v626 = vld [vmem:[#allocation2 + $0x1f] sm:$0xff]
      %v627 = vld [vmem:[#allocation2 + $0x27] sm:$0xff]
      %v628 = vld [vmem:[#allocation2 + $0x2f] sm:$0xff]
      %v629 = vld [vmem:[#allocation2 + $0x37] sm:$0xff]
      %v630 = vld [vmem:[#allocation2 + $0x3f] sm:$0xff]
      %v631 = vld [vmem:[#allocation2 + $0x47] sm:$0xff]
      %v632 = vld [vmem:[#allocation2 + $0x4f] sm:$0xff]
      %v633 = vld [vmem:[#allocation2 + $0x57] sm:$0xff]
      %v634 = vld [vmem:[#allocation2 + $0x5f] sm:$0xff]
      %v635 = vld [vmem:[#allocation2 + $0x67] sm:$0xff]
      %v636 = vld [vmem:[#allocation2 + $0x6f] sm:$0xff]
      %v637 = vld [vmem:[#allocation2 + $0x77] sm:$0xff]
      %v638 = vld [vmem:[#allocation2 + $0x7f] sm:$0xff]
      %v639 = vld [vmem:[#allocation2 + $0x87] sm:$0xff]
      %v640 = vld [vmem:[#allocation2 + $0x8f] sm:$0xff]
      %v641 = vld [vmem:[#allocation2 + $0x97] sm:$0xff]
      %v642 = vld [vmem:[#allocation2 + $0x9f] sm:$0xff]
      %v643 = vld [vmem:[#allocation2 + $0x18] sm:$0xff]
      %v644 = vld [vmem:[#allocation2 + $0x20] sm:$0xff]
      %v645 = vld [vmem:[#allocation2 + $0x28] sm:$0xff]
      %v646 = vld [vmem:[#allocation2 + $0x30] sm:$0xff]
      %v647 = vld [vmem:[#allocation2 + $0x38] sm:$0xff]
      %v648 = vld [vmem:[#allocation2 + $0x40] sm:$0xff]
      %v649 = vld [vmem:[#allocation2 + $0x48] sm:$0xff]
      %v650 = vld [vmem:[#allocation2 + $0x50] sm:$0xff]
      %v651 = vld [vmem:[#allocation2 + $0x58] sm:$0xff]
      %v652 = vld [vmem:[#allocation2 + $0x60] sm:$0xff]
      %v653 = vld [vmem:[#allocation2 + $0x68] sm:$0xff]
      %v654 = vld [vmem:[#allocation2 + $0x70] sm:$0xff]
      %v655 = vld [vmem:[#allocation2 + $0x78] sm:$0xff]
      %v656 = vld [vmem:[#allocation2 + $0x80] sm:$0xff]
      %v657 = vld [vmem:[#allocation2 + $0x88] sm:$0xff]
      %v658 = vld [vmem:[#allocation2 + $0x90] sm:$0xff]
      %v659 = vld [vmem:[#allocation2 + $0x98] sm:$0xff]
      %v660 = vld [vmem:[#allocation2 + $0xa0] sm:$0xff]
      %v661 = vld [vmem:[#allocation2 + $0x19] sm:$0xff]
      %v662 = vld [vmem:[#allocation2 + $0x21] sm:$0xff]
      %v663 = vld [vmem:[#allocation2 + $0x29] sm:$0xff]
      %v664 = vld [vmem:[#allocation2 + $0x31] sm:$0xff]
      %v665 = vld [vmem:[#allocation2 + $0x39] sm:$0xff]
      %v666 = vld [vmem:[#allocation2 + $0x41] sm:$0xff]
      %v667 = vld [vmem:[#allocation2 + $0x49] sm:$0xff]
      %v668 = vld [vmem:[#allocation2 + $0x51] sm:$0xff]
      %v669 = vld [vmem:[#allocation2 + $0x59] sm:$0xff]
      %v670 = vld [vmem:[#allocation2 + $0x61] sm:$0xff]
      %v671 = vld [vmem:[#allocation2 + $0x69] sm:$0xff]
      %v672 = vld [vmem:[#allocation2 + $0x71] sm:$0xff]
      %v673 = vld [vmem:[#allocation2 + $0x79] sm:$0xff]
      %v674 = vld [vmem:[#allocation2 + $0x81] sm:$0xff]
      %v675 = vld [vmem:[#allocation2 + $0x89] sm:$0xff]
      %v676 = vld [vmem:[#allocation2 + $0x91] sm:$0xff]
      %v677 = vld [vmem:[#allocation2 + $0x99] sm:$0xff]
      %v678 = vld [vmem:[#allocation2 + $0xa1] sm:$0xff]
      %v679 = vld [vmem:[#allocation2 + $0xa9] sm:$0xff]
      %v680 = vld [vmem:[#allocation2 + $0xb1] sm:$0xff]
      %v681 = vld [vmem:[#allocation2 + $0x2a] sm:$0xff]
      %v682 = vld [vmem:[#allocation2 + $0x32] sm:$0xff]
      %v683 = vld [vmem:[#allocation2 + $0x3a] sm:$0xff]
      %v684 = vld [vmem:[#allocation2 + $0x42] sm:$0xff]
      %v685 = vld [vmem:[#allocation2 + $0x4a] sm:$0xff]
      %v686 = vld [vmem:[#allocation2 + $0x52] sm:$0xff]
      %v687 = vld [vmem:[#allocation2 + $0x5a] sm:$0xff]
      %v688 = vld [vmem:[#allocation2 + $0x62] sm:$0xff]
      %v689 = vld [vmem:[#allocation2 + $0x6a] sm:$0xff]
      %v690 = vld [vmem:[#allocation2 + $0x72] sm:$0xff]
      %v691 = vld [vmem:[#allocation2 + $0x7a] sm:$0xff]
      %v692 = vld [vmem:[#allocation2 + $0x82] sm:$0xff]
      %v693 = vld [vmem:[#allocation2 + $0x8a] sm:$0xff]
      %v694 = vld [vmem:[#allocation2 + $0x92] sm:$0xff]
      %v695 = vld [vmem:[#allocation2 + $0x9a] sm:$0xff]
      %v696 = vld [vmem:[#allocation2 + $0xa2] sm:$0xff]
      %v697 = vld [vmem:[#allocation2 + $0xaa] sm:$0xff]
      %v698 = vld [vmem:[#allocation2 + $0xb2] sm:$0xff]
      %v699 = vld [vmem:[#allocation2 + $0x2b] sm:$0xff]
      %v700 = vld [vmem:[#allocation2 + $0x33] sm:$0xff]
      %v701 = vld [vmem:[#allocation2 + $0x3b] sm:$0xff]
      %v702 = vld [vmem:[#allocation2 + $0x43] sm:$0xff]
      %v703 = vld [vmem:[#allocation2 + $0x4b] sm:$0xff]
      %v704 = vld [vmem:[#allocation2 + $0x53] sm:$0xff]
      %v705 = vld [vmem:[#allocation2 + $0x5b] sm:$0xff]
      %v706 = vld [vmem:[#allocation2 + $0x63] sm:$0xff]
      %v707 = vld [vmem:[#allocation2 + $0x6b] sm:$0xff]
      %v708 = vld [vmem:[#allocation2 + $0x73] sm:$0xff]
      %v709 = vld [vmem:[#allocation2 + $0x7b] sm:$0xff]
      %v710 = vld [vmem:[#allocation2 + $0x83] sm:$0xff]
      %v711 = vld [vmem:[#allocation2 + $0x8b] sm:$0xff]
      %v712 = vld [vmem:[#allocation2 + $0x93] sm:$0xff]
      %v713 = vld [vmem:[#allocation2 + $0x9b] sm:$0xff]
      %v714 = vld [vmem:[#allocation2 + $0xa3] sm:$0xff]
      %v715 = vld [vmem:[#allocation2 + $0xab] sm:$0xff]
      %v716 = vld [vmem:[#allocation2 + $0xb3] sm:$0xff]
      %735 = vrot.lane.b32.xlu0 %v605, 8
      %v736 = vpop.permute.xlu0 %735
      %737 = vrot.lane.b32.xlu0 %v606, 8
      %v738 = vpop.permute.xlu0 %737
      %739 = vrot.lane.b32.xlu0 %v607, 8
      %v740 = vpop.permute.xlu0 %739
      %741 = vrot.lane.b32.xlu0 %v608, 8
      %v742 = vpop.permute.xlu0 %741
      %743 = vrot.lane.b32.xlu0 %v609, 8
      %v744 = vpop.permute.xlu0 %743
      %745 = vrot.lane.b32.xlu0 %v610, 8
      %v746 = vpop.permute.xlu0 %745
      %747 = vrot.lane.b32.xlu0 %v611, 8
      %v748 = vpop.permute.xlu0 %747
      %749 = vrot.lane.b32.xlu0 %v612, 8
      %v750 = vpop.permute.xlu0 %749
      %751 = vrot.lane.b32.xlu0 %v613, 8
      %v752 = vpop.permute.xlu0 %751
      %753 = vrot.lane.b32.xlu0 %v614, 8
      %v754 = vpop.permute.xlu0 %753
      %755 = vrot.lane.b32.xlu0 %v615, 8
      %v756 = vpop.permute.xlu0 %755
      %757 = vrot.lane.b32.xlu0 %v616, 8
      %v758 = vpop.permute.xlu0 %757
      %759 = vrot.lane.b32.xlu0 %v617, 8
      %v760 = vpop.permute.xlu0 %759
      %761 = vrot.lane.b32.xlu0 %v618, 8
      %v762 = vpop.permute.xlu0 %761
      %763 = vrot.lane.b32.xlu0 %v619, 8
      %v764 = vpop.permute.xlu0 %763
      %765 = vrot.lane.b32.xlu0 %v620, 8
      %v766 = vpop.permute.xlu0 %765
      %767 = vrot.lane.b32.xlu0 %v621, 8
      %v768 = vpop.permute.xlu0 %767
      %769 = vrot.lane.b32.xlu0 %v622, 8
      %v770 = vpop.permute.xlu0 %769
      %807 = vrot.lane.b32.xlu0 %v623, 16
      %v808 = vpop.permute.xlu0 %807
      %809 = vrot.lane.b32.xlu0 %v624, 16
      %v810 = vpop.permute.xlu0 %809
      %811 = vrot.lane.b32.xlu0 %v625, 16
      %v812 = vpop.permute.xlu0 %811
      %813 = vrot.lane.b32.xlu0 %v626, 16
      %v814 = vpop.permute.xlu0 %813
      %815 = vrot.lane.b32.xlu0 %v627, 16
      %v816 = vpop.permute.xlu0 %815
      %817 = vrot.lane.b32.xlu0 %v628, 16
      %v818 = vpop.permute.xlu0 %817
      %819 = vrot.lane.b32.xlu0 %v629, 16
      %v820 = vpop.permute.xlu0 %819
      %821 = vrot.lane.b32.xlu0 %v630, 16
      %v822 = vpop.permute.xlu0 %821
      %823 = vrot.lane.b32.xlu0 %v631, 16
      %v824 = vpop.permute.xlu0 %823
      %825 = vrot.lane.b32.xlu0 %v632, 16
      %v826 = vpop.permute.xlu0 %825
      %827 = vrot.lane.b32.xlu0 %v633, 16
      %v828 = vpop.permute.xlu0 %827
      %829 = vrot.lane.b32.xlu0 %v634, 16
      %v830 = vpop.permute.xlu0 %829
      %831 = vrot.lane.b32.xlu0 %v635, 16
      %v832 = vpop.permute.xlu0 %831
      %833 = vrot.lane.b32.xlu0 %v636, 16
      %v834 = vpop.permute.xlu0 %833
      %835 = vrot.lane.b32.xlu0 %v637, 16
      %v836 = vpop.permute.xlu0 %835
      %837 = vrot.lane.b32.xlu0 %v638, 16
      %v838 = vpop.permute.xlu0 %837
      %839 = vrot.lane.b32.xlu0 %v639, 16
      %v840 = vpop.permute.xlu0 %839
      %841 = vrot.lane.b32.xlu0 %v640, 16
      %v842 = vpop.permute.xlu0 %841
      %863 = vrot.lane.b32.xlu0 %v625, 24
      %v864 = vpop.permute.xlu0 %863
      %865 = vrot.lane.b32.xlu0 %v626, 24
      %v866 = vpop.permute.xlu0 %865
      %867 = vrot.lane.b32.xlu0 %v627, 24
      %v868 = vpop.permute.xlu0 %867
      %869 = vrot.lane.b32.xlu0 %v628, 24
      %v870 = vpop.permute.xlu0 %869
      %871 = vrot.lane.b32.xlu0 %v629, 24
      %v872 = vpop.permute.xlu0 %871
      %873 = vrot.lane.b32.xlu0 %v630, 24
      %v874 = vpop.permute.xlu0 %873
      %875 = vrot.lane.b32.xlu0 %v631, 24
      %v876 = vpop.permute.xlu0 %875
      %877 = vrot.lane.b32.xlu0 %v632, 24
      %v878 = vpop.permute.xlu0 %877
      %879 = vrot.lane.b32.xlu0 %v633, 24
      %v880 = vpop.permute.xlu0 %879
      %881 = vrot.lane.b32.xlu0 %v634, 24
      %v882 = vpop.permute.xlu0 %881
      %883 = vrot.lane.b32.xlu0 %v635, 24
      %v884 = vpop.permute.xlu0 %883
      %885 = vrot.lane.b32.xlu0 %v636, 24
      %v886 = vpop.permute.xlu0 %885
      %887 = vrot.lane.b32.xlu0 %v637, 24
      %v888 = vpop.permute.xlu0 %887
      %889 = vrot.lane.b32.xlu0 %v638, 24
      %v890 = vpop.permute.xlu0 %889
      %891 = vrot.lane.b32.xlu0 %v639, 24
      %v892 = vpop.permute.xlu0 %891
      %893 = vrot.lane.b32.xlu0 %v640, 24
      %v894 = vpop.permute.xlu0 %893
      %895 = vrot.lane.b32.xlu0 %v641, 24
      %v896 = vpop.permute.xlu0 %895
      %897 = vrot.lane.b32.xlu0 %v642, 24
      %v898 = vpop.permute.xlu0 %897
      %935 = vrot.lane.b32.xlu0 %v643, 32
      %v936 = vpop.permute.xlu0 %935
      %937 = vrot.lane.b32.xlu0 %v644, 32
      %v938 = vpop.permute.xlu0 %937
      %939 = vrot.lane.b32.xlu0 %v645, 32
      %v940 = vpop.permute.xlu0 %939
      %941 = vrot.lane.b32.xlu0 %v646, 32
      %v942 = vpop.permute.xlu0 %941
      %943 = vrot.lane.b32.xlu0 %v647, 32
      %v944 = vpop.permute.xlu0 %943
      %945 = vrot.lane.b32.xlu0 %v648, 32
      %v946 = vpop.permute.xlu0 %945
      %947 = vrot.lane.b32.xlu0 %v649, 32
      %v948 = vpop.permute.xlu0 %947
      %949 = vrot.lane.b32.xlu0 %v650, 32
      %v950 = vpop.permute.xlu0 %949
      %951 = vrot.lane.b32.xlu0 %v651, 32
      %v952 = vpop.permute.xlu0 %951
      %953 = vrot.lane.b32.xlu0 %v652, 32
      %v954 = vpop.permute.xlu0 %953
      %955 = vrot.lane.b32.xlu0 %v653, 32
      %v956 = vpop.permute.xlu0 %955
      %957 = vrot.lane.b32.xlu0 %v654, 32
      %v958 = vpop.permute.xlu0 %957
      %959 = vrot.lane.b32.xlu0 %v655, 32
      %v960 = vpop.permute.xlu0 %959
      %961 = vrot.lane.b32.xlu0 %v656, 32
      %v962 = vpop.permute.xlu0 %961
      %963 = vrot.lane.b32.xlu0 %v657, 32
      %v964 = vpop.permute.xlu0 %963
      %965 = vrot.lane.b32.xlu0 %v658, 32
      %v966 = vpop.permute.xlu0 %965
      %967 = vrot.lane.b32.xlu0 %v659, 32
      %v968 = vpop.permute.xlu0 %967
      %969 = vrot.lane.b32.xlu0 %v660, 32
      %v970 = vpop.permute.xlu0 %969
      %1007 = vrot.lane.b32.xlu0 %v661, 40
      %v1008 = vpop.permute.xlu0 %1007
      %1009 = vrot.lane.b32.xlu0 %v662, 40
      %v1010 = vpop.permute.xlu0 %1009
      %1011 = vrot.lane.b32.xlu0 %v663, 40
      %v1012 = vpop.permute.xlu0 %1011
      %1013 = vrot.lane.b32.xlu0 %v664, 40
      %v1014 = vpop.permute.xlu0 %1013
      %1015 = vrot.lane.b32.xlu0 %v665, 40
      %v1016 = vpop.permute.xlu0 %1015
      %1017 = vrot.lane.b32.xlu0 %v666, 40
      %v1018 = vpop.permute.xlu0 %1017
      %1019 = vrot.lane.b32.xlu0 %v667, 40
      %v1020 = vpop.permute.xlu0 %1019
      %1021 = vrot.lane.b32.xlu0 %v668, 40
      %v1022 = vpop.permute.xlu0 %1021
      %1023 = vrot.lane.b32.xlu0 %v669, 40
      %v1024 = vpop.permute.xlu0 %1023
      %1025 = vrot.lane.b32.xlu0 %v670, 40
      %v1026 = vpop.permute.xlu0 %1025
      %1027 = vrot.lane.b32.xlu0 %v671, 40
      %v1028 = vpop.permute.xlu0 %1027
      %1029 = vrot.lane.b32.xlu0 %v672, 40
      %v1030 = vpop.permute.xlu0 %1029
      %1031 = vrot.lane.b32.xlu0 %v673, 40
      %v1032 = vpop.permute.xlu0 %1031
      %1033 = vrot.lane.b32.xlu0 %v674, 40
      %v1034 = vpop.permute.xlu0 %1033
      %1035 = vrot.lane.b32.xlu0 %v675, 40
      %v1036 = vpop.permute.xlu0 %1035
      %1037 = vrot.lane.b32.xlu0 %v676, 40
      %v1038 = vpop.permute.xlu0 %1037
      %1039 = vrot.lane.b32.xlu0 %v677, 40
      %v1040 = vpop.permute.xlu0 %1039
      %1041 = vrot.lane.b32.xlu0 %v678, 40
      %v1042 = vpop.permute.xlu0 %1041
      %1063 = vrot.lane.b32.xlu0 %v663, 48
      %v1064 = vpop.permute.xlu0 %1063
      %1065 = vrot.lane.b32.xlu0 %v664, 48
      %v1066 = vpop.permute.xlu0 %1065
      %1067 = vrot.lane.b32.xlu0 %v665, 48
      %v1068 = vpop.permute.xlu0 %1067
      %1069 = vrot.lane.b32.xlu0 %v666, 48
      %v1070 = vpop.permute.xlu0 %1069
      %1071 = vrot.lane.b32.xlu0 %v667, 48
      %v1072 = vpop.permute.xlu0 %1071
      %1073 = vrot.lane.b32.xlu0 %v668, 48
      %v1074 = vpop.permute.xlu0 %1073
      %1075 = vrot.lane.b32.xlu0 %v669, 48
      %v1076 = vpop.permute.xlu0 %1075
      %1077 = vrot.lane.b32.xlu0 %v670, 48
      %v1078 = vpop.permute.xlu0 %1077
      %1079 = vrot.lane.b32.xlu0 %v671, 48
      %v1080 = vpop.permute.xlu0 %1079
      %1081 = vrot.lane.b32.xlu0 %v672, 48
      %v1082 = vpop.permute.xlu0 %1081
      %1083 = vrot.lane.b32.xlu0 %v673, 48
      %v1084 = vpop.permute.xlu0 %1083
      %1085 = vrot.lane.b32.xlu0 %v674, 48
      %v1086 = vpop.permute.xlu0 %1085
      %1087 = vrot.lane.b32.xlu0 %v675, 48
      %v1088 = vpop.permute.xlu0 %1087
      %1089 = vrot.lane.b32.xlu0 %v676, 48
      %v1090 = vpop.permute.xlu0 %1089
      %1091 = vrot.lane.b32.xlu0 %v677, 48
      %v1092 = vpop.permute.xlu0 %1091
      %1093 = vrot.lane.b32.xlu0 %v678, 48
      %v1094 = vpop.permute.xlu0 %1093
      %1095 = vrot.lane.b32.xlu0 %v679, 48
      %v1096 = vpop.permute.xlu0 %1095
      %1097 = vrot.lane.b32.xlu0 %v680, 48
      %v1098 = vpop.permute.xlu0 %1097
      %1135 = vrot.lane.b32.xlu0 %v681, 56
      %v1136 = vpop.permute.xlu0 %1135
      %1137 = vrot.lane.b32.xlu0 %v682, 56
      %v1138 = vpop.permute.xlu0 %1137
      %1139 = vrot.lane.b32.xlu0 %v683, 56
      %v1140 = vpop.permute.xlu0 %1139
      %1141 = vrot.lane.b32.xlu0 %v684, 56
      %v1142 = vpop.permute.xlu0 %1141
      %1143 = vrot.lane.b32.xlu0 %v685, 56
      %v1144 = vpop.permute.xlu0 %1143
      %1145 = vrot.lane.b32.xlu0 %v686, 56
      %v1146 = vpop.permute.xlu0 %1145
      %1147 = vrot.lane.b32.xlu0 %v687, 56
      %v1148 = vpop.permute.xlu0 %1147
      %1149 = vrot.lane.b32.xlu0 %v688, 56
      %v1150 = vpop.permute.xlu0 %1149
      %1151 = vrot.lane.b32.xlu0 %v689, 56
      %v1152 = vpop.permute.xlu0 %1151
      %1153 = vrot.lane.b32.xlu0 %v690, 56
      %v1154 = vpop.permute.xlu0 %1153
      %1155 = vrot.lane.b32.xlu0 %v691, 56
      %v1156 = vpop.permute.xlu0 %1155
      %1157 = vrot.lane.b32.xlu0 %v692, 56
      %v1158 = vpop.permute.xlu0 %1157
      %1159 = vrot.lane.b32.xlu0 %v693, 56
      %v1160 = vpop.permute.xlu0 %1159
      %1161 = vrot.lane.b32.xlu0 %v694, 56
      %v1162 = vpop.permute.xlu0 %1161
      %1163 = vrot.lane.b32.xlu0 %v695, 56
      %v1164 = vpop.permute.xlu0 %1163
      %1165 = vrot.lane.b32.xlu0 %v696, 56
      %v1166 = vpop.permute.xlu0 %1165
      %1167 = vrot.lane.b32.xlu0 %v697, 56
      %v1168 = vpop.permute.xlu0 %1167
      %1169 = vrot.lane.b32.xlu0 %v698, 56
      %v1170 = vpop.permute.xlu0 %1169
      %1207 = vrot.lane.b32.xlu0 %v699, 64
      %v1208 = vpop.permute.xlu0 %1207
      %1209 = vrot.lane.b32.xlu0 %v700, 64
      %v1210 = vpop.permute.xlu0 %1209
      %1211 = vrot.lane.b32.xlu0 %v701, 64
      %v1212 = vpop.permute.xlu0 %1211
      %1213 = vrot.lane.b32.xlu0 %v702, 64
      %v1214 = vpop.permute.xlu0 %1213
      %1215 = vrot.lane.b32.xlu0 %v703, 64
      %v1216 = vpop.permute.xlu0 %1215
      %1217 = vrot.lane.b32.xlu0 %v704, 64
      %v1218 = vpop.permute.xlu0 %1217
      %1219 = vrot.lane.b32.xlu0 %v705, 64
      %v1220 = vpop.permute.xlu0 %1219
      %1221 = vrot.lane.b32.xlu0 %v706, 64
      %v1222 = vpop.permute.xlu0 %1221
      %1223 = vrot.lane.b32.xlu0 %v707, 64
      %v1224 = vpop.permute.xlu0 %1223
      %1225 = vrot.lane.b32.xlu0 %v708, 64
      %v1226 = vpop.permute.xlu0 %1225
      %1227 = vrot.lane.b32.xlu0 %v709, 64
      %v1228 = vpop.permute.xlu0 %1227
      %1229 = vrot.lane.b32.xlu0 %v710, 64
      %v1230 = vpop.permute.xlu0 %1229
      %1231 = vrot.lane.b32.xlu0 %v711, 64
      %v1232 = vpop.permute.xlu0 %1231
      %1233 = vrot.lane.b32.xlu0 %v712, 64
      %v1234 = vpop.permute.xlu0 %1233
      %1235 = vrot.lane.b32.xlu0 %v713, 64
      %v1236 = vpop.permute.xlu0 %1235
      %1237 = vrot.lane.b32.xlu0 %v714, 64
      %v1238 = vpop.permute.xlu0 %1237
      %1239 = vrot.lane.b32.xlu0 %v715, 64
      %v1240 = vpop.permute.xlu0 %1239
      %1241 = vrot.lane.b32.xlu0 %v716, 64
      %v1242 = vpop.permute.xlu0 %1241
      %v1261 = vsel %vm172, %v587, %v736
      %v1262 = vsel %vm172, %v588, %v738
      %v1263 = vsel %vm172, %v589, %v740
      %v1264 = vsel %vm172, %v590, %v742
      %v1265 = vsel %vm172, %v591, %v744
      %v1266 = vsel %vm172, %v592, %v746
      %v1267 = vsel %vm172, %v593, %v748
      %v1268 = vsel %vm172, %v594, %v750
      %v1269 = vsel %vm172, %v595, %v752
      %v1270 = vsel %vm172, %v596, %v754
      %v1271 = vsel %vm172, %v597, %v756
      %v1272 = vsel %vm172, %v598, %v758
      %v1273 = vsel %vm172, %v599, %v760
      %v1274 = vsel %vm172, %v600, %v762
      %v1275 = vsel %vm172, %v601, %v764
      %v1276 = vsel %vm172, %v602, %v766
      %v1277 = vsel %vm172, %v603, %v768
      %v1278 = vsel %vm172, %v604, %v770
      %vm1279 = vcmask 130048
      %v1280 = vsel %vm1279, %v1261, %v808
      %v1281 = vsel %vm1279, %v1262, %v810
      %v1282 = vsel %vm1279, %v1263, %v812
      %v1283 = vsel %vm1279, %v1264, %v814
      %v1284 = vsel %vm1279, %v1265, %v816
      %v1285 = vsel %vm1279, %v1266, %v818
      %v1286 = vsel %vm1279, %v1267, %v820
      %v1287 = vsel %vm1279, %v1268, %v822
      %v1288 = vsel %vm1279, %v1269, %v824
      %v1289 = vsel %vm1279, %v1270, %v826
      %v1290 = vsel %vm1279, %v1271, %v828
      %v1291 = vsel %vm1279, %v1272, %v830
      %v1292 = vsel %vm1279, %v1273, %v832
      %v1293 = vsel %vm1279, %v1274, %v834
      %v1294 = vsel %vm1279, %v1275, %v836
      %v1295 = vsel %vm1279, %v1276, %v838
      %v1296 = vsel %vm1279, %v1277, %v840
      %v1297 = vsel %vm1279, %v1278, %v842
      %vm1298 = vcmask 195584
      %v1299 = vsel %vm1298, %v1280, %v864
      %v1300 = vsel %vm1298, %v1281, %v866
      %v1301 = vsel %vm1298, %v1282, %v868
      %v1302 = vsel %vm1298, %v1283, %v870
      %v1303 = vsel %vm1298, %v1284, %v872
      %v1304 = vsel %vm1298, %v1285, %v874
      %v1305 = vsel %vm1298, %v1286, %v876
      %v1306 = vsel %vm1298, %v1287, %v878
      %v1307 = vsel %vm1298, %v1288, %v880
      %v1308 = vsel %vm1298, %v1289, %v882
      %v1309 = vsel %vm1298, %v1290, %v884
      %v1310 = vsel %vm1298, %v1291, %v886
      %v1311 = vsel %vm1298, %v1292, %v888
      %v1312 = vsel %vm1298, %v1293, %v890
      %v1313 = vsel %vm1298, %v1294, %v892
      %v1314 = vsel %vm1298, %v1295, %v894
      %v1315 = vsel %vm1298, %v1296, %v896
      %v1316 = vsel %vm1298, %v1297, %v898
      %vm1317 = vcmask 261120
      %v1318 = vsel %vm1317, %v1299, %v936
      %v1319 = vsel %vm1317, %v1300, %v938
      %v1320 = vsel %vm1317, %v1301, %v940
      %v1321 = vsel %vm1317, %v1302, %v942
      %v1322 = vsel %vm1317, %v1303, %v944
      %v1323 = vsel %vm1317, %v1304, %v946
      %v1324 = vsel %vm1317, %v1305, %v948
      %v1325 = vsel %vm1317, %v1306, %v950
      %v1326 = vsel %vm1317, %v1307, %v952
      %v1327 = vsel %vm1317, %v1308, %v954
      %v1328 = vsel %vm1317, %v1309, %v956
      %v1329 = vsel %vm1317, %v1310, %v958
      %v1330 = vsel %vm1317, %v1311, %v960
      %v1331 = vsel %vm1317, %v1312, %v962
      %v1332 = vsel %vm1317, %v1313, %v964
      %v1333 = vsel %vm1317, %v1314, %v966
      %v1334 = vsel %vm1317, %v1315, %v968
      %v1335 = vsel %vm1317, %v1316, %v970
      %v1336 = vsel %vm262, %v1318, %v1008
      %v1337 = vsel %vm262, %v1319, %v1010
      %v1338 = vsel %vm262, %v1320, %v1012
      %v1339 = vsel %vm262, %v1321, %v1014
      %v1340 = vsel %vm262, %v1322, %v1016
      %v1341 = vsel %vm262, %v1323, %v1018
      %v1342 = vsel %vm262, %v1324, %v1020
      %v1343 = vsel %vm262, %v1325, %v1022
      %v1344 = vsel %vm262, %v1326, %v1024
      %v1345 = vsel %vm262, %v1327, %v1026
      %v1346 = vsel %vm262, %v1328, %v1028
      %v1347 = vsel %vm262, %v1329, %v1030
      %v1348 = vsel %vm262, %v1330, %v1032
      %v1349 = vsel %vm262, %v1331, %v1034
      %v1350 = vsel %vm262, %v1332, %v1036
      %v1351 = vsel %vm262, %v1333, %v1038
      %v1352 = vsel %vm262, %v1334, %v1040
      %v1353 = vsel %vm262, %v1335, %v1042
      %vm1354 = vcmask 392192
      %v1355 = vsel %vm1354, %v1336, %v1064
      %v1356 = vsel %vm1354, %v1337, %v1066
      %v1357 = vsel %vm1354, %v1338, %v1068
      %v1358 = vsel %vm1354, %v1339, %v1070
      %v1359 = vsel %vm1354, %v1340, %v1072
      %v1360 = vsel %vm1354, %v1341, %v1074
      %v1361 = vsel %vm1354, %v1342, %v1076
      %v1362 = vsel %vm1354, %v1343, %v1078
      %v1363 = vsel %vm1354, %v1344, %v1080
      %v1364 = vsel %vm1354, %v1345, %v1082
      %v1365 = vsel %vm1354, %v1346, %v1084
      %v1366 = vsel %vm1354, %v1347, %v1086
      %v1367 = vsel %vm1354, %v1348, %v1088
      %v1368 = vsel %vm1354, %v1349, %v1090
      %v1369 = vsel %vm1354, %v1350, %v1092
      %v1370 = vsel %vm1354, %v1351, %v1094
      %v1371 = vsel %vm1354, %v1352, %v1096
      %v1372 = vsel %vm1354, %v1353, %v1098
      %vm1373 = vcmask 457728
      %v1374 = vsel %vm1373, %v1355, %v1136
      %v1375 = vsel %vm1373, %v1356, %v1138
      %v1376 = vsel %vm1373, %v1357, %v1140
      %v1377 = vsel %vm1373, %v1358, %v1142
      %v1378 = vsel %vm1373, %v1359, %v1144
      %v1379 = vsel %vm1373, %v1360, %v1146
      %v1380 = vsel %vm1373, %v1361, %v1148
      %v1381 = vsel %vm1373, %v1362, %v1150
      %v1382 = vsel %vm1373, %v1363, %v1152
      %v1383 = vsel %vm1373, %v1364, %v1154
      %v1384 = vsel %vm1373, %v1365, %v1156
      %v1385 = vsel %vm1373, %v1366, %v1158
      %v1386 = vsel %vm1373, %v1367, %v1160
      %v1387 = vsel %vm1373, %v1368, %v1162
      %v1388 = vsel %vm1373, %v1369, %v1164
      %v1389 = vsel %vm1373, %v1370, %v1166
      %v1390 = vsel %vm1373, %v1371, %v1168
      %v1391 = vsel %vm1373, %v1372, %v1170
      %vm1392 = vcmask 523264
      %v1393 = vsel %vm1392, %v1374, %v1208
      %v1394 = vsel %vm1392, %v1375, %v1210
      %v1395 = vsel %vm1392, %v1376, %v1212
      %v1396 = vsel %vm1392, %v1377, %v1214
      %v1397 = vsel %vm1392, %v1378, %v1216
      %v1398 = vsel %vm1392, %v1379, %v1218
      %v1399 = vsel %vm1392, %v1380, %v1220
      %v1400 = vsel %vm1392, %v1381, %v1222
      %v1401 = vsel %vm1392, %v1382, %v1224
      %v1402 = vsel %vm1392, %v1383, %v1226
      %v1403 = vsel %vm1392, %v1384, %v1228
      %v1404 = vsel %vm1392, %v1385, %v1230
      %v1405 = vsel %vm1392, %v1386, %v1232
      %v1406 = vsel %vm1392, %v1387, %v1234
      %v1407 = vsel %vm1392, %v1388, %v1236
      %v1408 = vsel %vm1392, %v1389, %v1238
      %v1409 = vsel %vm1392, %v1390, %v1240
      %v1410 = vsel %vm1392, %v1391, %v1242
      %vm1411 = vcmask 588800
      %v1412 = vsel %vm1411, %v1393, 1.0
      %v1413 = vsel %vm1411, %v1394, 1.0
      %v1414 = vsel %vm1411, %v1395, 1.0
      %v1415 = vsel %vm1411, %v1396, 1.0
      %v1416 = vsel %vm1411, %v1397, 1.0
      %v1417 = vsel %vm1411, %v1398, 1.0
      %v1418 = vsel %vm1411, %v1399, 1.0
      %v1419 = vsel %vm1411, %v1400, 1.0
      %v1420 = vsel %vm1411, %v1401, 1.0
      %v1421 = vsel %vm1411, %v1402, 1.0
      %v1422 = vsel %vm1411, %v1403, 1.0
      %v1423 = vsel %vm1411, %v1404, 1.0
      %v1424 = vsel %vm1411, %v1405, 1.0
      %v1425 = vsel %vm1411, %v1406, 1.0
      %v1426 = vsel %vm1411, %v1407, 1.0
      %v1427 = vsel %vm1411, %v1408, 1.0
      %v1428 = vsel %vm1411, %v1409, 1.0
      %v1429 = vsel %vm1411, %v1410, 1.0
      %v1430 = vpack.c.bf16 %v1413, %v1412
      %v1431 = vpack.c.bf16 %v1415, %v1414
      %v1432 = vpack.c.bf16 %v1417, %v1416
      %v1433 = vpack.c.bf16 %v1419, %v1418
      %v1434 = vpack.c.bf16 %v1421, %v1420
      %v1435 = vpack.c.bf16 %v1423, %v1422
      %v1436 = vpack.c.bf16 %v1425, %v1424
      %v1437 = vpack.c.bf16 %v1427, %v1426
      %v1438 = vpack.c.bf16 %v1429, %v1428
      %v1439 = vld [vmem:[%s2] sm:$0xf]
      %v1440 = vld [vmem:[%s2 + $0x4] sm:$0xf]
      %v1441 = vld [vmem:[%s2 + $0x8] sm:$0xf]
      %v1442 = vld [vmem:[%s2 + $0xc] sm:$0xf]
      %v1443 = vld [vmem:[%s2 + $0x10] sm:$0xf]
      %v1444 = vld [vmem:[%s2 + $0x14] sm:$0xf]
      %v1445 = vld [vmem:[%s2 + $0x18] sm:$0xf]
      %v1446 = vld [vmem:[%s2 + $0x1c] sm:$0xf]
      %v1447 = vld [vmem:[%s2 + $0x20] sm:$0xf]
      %v1448 = vld [vmem:[%s2 + $0x24] sm:$0xf]
      %v1459 = vunpack.c.l.b16 %v1439
      %v1460 = vunpack.c.l.b16 %v1440
      %v1461 = vunpack.c.l.b16 %v1441
      %v1462 = vunpack.c.l.b16 %v1442
      %v1463 = vunpack.c.l.b16 %v1443
      %v1464 = vunpack.c.l.b16 %v1444
      %v1465 = vunpack.c.l.b16 %v1445
      %v1466 = vunpack.c.l.b16 %v1446
      %v1467 = vunpack.c.l.b16 %v1447
      %v1468 = vunpack.c.l.b16 %v1448
      %v1469 = vpack.c.b16 %v1460, %v1459
      %v1470 = vpack.c.b16 %v1462, %v1461
      %v1471 = vpack.c.b16 %v1464, %v1463
      %v1472 = vpack.c.b16 %v1466, %v1465
      %v1473 = vpack.c.b16 %v1468, %v1467
      %vm1479 = vcmask 654336
      %v1481 = vsel %vm1479, %v1430, 0
      %v1484 = vsel %vm1479, %v1431, 0
      %v1487 = vsel %vm1479, %v1432, 0
      %v1490 = vsel %vm1479, %v1433, 0
      %v1493 = vsel %vm1479, %v1434, 0
      %v1496 = vsel %vm1479, %v1435, 0
      %v1499 = vsel %vm1479, %v1436, 0
      %v1502 = vsel %vm1479, %v1437, 0
      %v1505 = vsel %vm1479, %v1438, 0
      %1507 = vmatpush.bf16.msra.mxu0 0
      %1508 = vmatpush.bf16.msra.mxu0 0
      %1509 = vmatpush.bf16.msra.mxu0 0
      %1510 = vmatpush.bf16.msra.mxu0 %v1473
      %1511 = vmatpush.bf16.msra.mxu0 %v1472
      %1512 = vmatpush.bf16.msra.mxu0 %v1471
      %1513 = vmatpush.bf16.msra.mxu0 %v1470
      %1514 = vmatpush.bf16.msra.mxu0 %v1469
      %1515 = vmatmul.bf16.gmra.mxu0 %v1481
      %v1516 = vpop.f32.mrf.mxu0
      %v1517 = vadd.f32 0.0, %v1516
      %v1518 = vpop.f32.mrf.mxu0
      %v1519 = vadd.f32 0.0, %v1518
      %1520 = vmatmul.bf16.gmra.mxu0 %v1484
      %v1521 = vpop.f32.mrf.mxu0
      %v1522 = vadd.f32 0.0, %v1521
      %v1523 = vpop.f32.mrf.mxu0
      %v1524 = vadd.f32 0.0, %v1523
      %1525 = vmatmul.bf16.gmra.mxu0 %v1487
      %v1526 = vpop.f32.mrf.mxu0
      %v1527 = vadd.f32 0.0, %v1526
      %v1528 = vpop.f32.mrf.mxu0
      %v1529 = vadd.f32 0.0, %v1528
      %1530 = vmatmul.bf16.gmra.mxu0 %v1490
      %v1531 = vpop.f32.mrf.mxu0
      %v1532 = vadd.f32 0.0, %v1531
      %v1533 = vpop.f32.mrf.mxu0
      %v1534 = vadd.f32 0.0, %v1533
      %1535 = vmatmul.bf16.gmra.mxu0 %v1493
      %v1536 = vpop.f32.mrf.mxu0
      %v1537 = vadd.f32 0.0, %v1536
      %v1538 = vpop.f32.mrf.mxu0
      %v1539 = vadd.f32 0.0, %v1538
      %1540 = vmatmul.bf16.gmra.mxu0 %v1496
      %v1541 = vpop.f32.mrf.mxu0
      %v1542 = vadd.f32 0.0, %v1541
      %v1543 = vpop.f32.mrf.mxu0
      %v1544 = vadd.f32 0.0, %v1543
      %1545 = vmatmul.bf16.gmra.mxu0 %v1499
      %v1546 = vpop.f32.mrf.mxu0
      %v1547 = vadd.f32 0.0, %v1546
      %v1548 = vpop.f32.mrf.mxu0
      %v1549 = vadd.f32 0.0, %v1548
      %1550 = vmatmul.bf16.gmra.mxu0 %v1502
      %v1551 = vpop.f32.mrf.mxu0
      %v1552 = vadd.f32 0.0, %v1551
      %v1553 = vpop.f32.mrf.mxu0
      %v1554 = vadd.f32 0.0, %v1553
      %1555 = vmatmul.bf16.gmra.mxu0 %v1505
      %v1556 = vpop.f32.mrf.mxu0
      %v1557 = vadd.f32 0.0, %v1556
      %v1558 = vpop.f32.mrf.mxu0
      %v1559 = vadd.f32 0.0, %v1558
      %1560 = vdwg.mxu0
      %v1561 = vmax.f32 %v1517, 0.0
      %v1562 = vmax.f32 %v1519, 0.0
      %v1563 = vmax.f32 %v1522, 0.0
      %v1564 = vmax.f32 %v1524, 0.0
      %v1565 = vmax.f32 %v1527, 0.0
      %v1566 = vmax.f32 %v1529, 0.0
      %v1567 = vmax.f32 %v1532, 0.0
      %v1568 = vmax.f32 %v1534, 0.0
      %v1569 = vmax.f32 %v1537, 0.0
      %v1570 = vmax.f32 %v1539, 0.0
      %v1571 = vmax.f32 %v1542, 0.0
      %v1572 = vmax.f32 %v1544, 0.0
      %v1573 = vmax.f32 %v1547, 0.0
      %v1574 = vmax.f32 %v1549, 0.0
      %v1575 = vmax.f32 %v1552, 0.0
      %v1576 = vmax.f32 %v1554, 0.0
      %v1577 = vmax.f32 %v1557, 0.0
      %v1578 = vmax.f32 %v1559, 0.0
      %v1579 = vpack.c.bf16 %v1561, %v1561
      %v1580 = vpack.c.bf16 %v1562, %v1562
      %v1581 = vpack.c.bf16 %v1563, %v1563
      %v1582 = vpack.c.bf16 %v1564, %v1564
      %v1583 = vpack.c.bf16 %v1565, %v1565
      %v1584 = vpack.c.bf16 %v1566, %v1566
      %v1585 = vpack.c.bf16 %v1567, %v1567
      %v1586 = vpack.c.bf16 %v1568, %v1568
      %v1587 = vpack.c.bf16 %v1569, %v1569
      %v1588 = vpack.c.bf16 %v1570, %v1570
      %v1589 = vpack.c.bf16 %v1571, %v1571
      %v1590 = vpack.c.bf16 %v1572, %v1572
      %v1591 = vpack.c.bf16 %v1573, %v1573
      %v1592 = vpack.c.bf16 %v1574, %v1574
      %v1593 = vpack.c.bf16 %v1575, %v1575
      %v1594 = vpack.c.bf16 %v1576, %v1576
      %v1595 = vpack.c.bf16 %v1577, %v1577
      %v1596 = vpack.c.bf16 %v1578, %v1578
      %1597 = vst [vmem:[%s170] sm:$0xf] %v1579
      %1598 = vst [vmem:[%s170 + $0x4] sm:$0xf] %v1580
      %1599 = vst [vmem:[%s170 + $0x8] sm:$0xf] %v1581
      %1600 = vst [vmem:[%s170 + $0xc] sm:$0xf] %v1582
      %1601 = vst [vmem:[%s170 + $0x10] sm:$0xf] %v1583
      %1602 = vst [vmem:[%s170 + $0x14] sm:$0xf] %v1584
      %1603 = vst [vmem:[%s170 + $0x18] sm:$0xf] %v1585
      %1604 = vst [vmem:[%s170 + $0x1c] sm:$0xf] %v1586
      %1605 = vst [vmem:[%s170 + $0x20] sm:$0xf] %v1587
      %1606 = vst [vmem:[%s170 + $0x24] sm:$0xf] %v1588
      %1607 = vst [vmem:[%s170 + $0x28] sm:$0xf] %v1589
      %1608 = vst [vmem:[%s170 + $0x2c] sm:$0xf] %v1590
      %1609 = vst [vmem:[%s170 + $0x30] sm:$0xf] %v1591
      %1610 = vst [vmem:[%s170 + $0x34] sm:$0xf] %v1592
      %1611 = vst [vmem:[%s170 + $0x38] sm:$0xf] %v1593
      %1612 = vst [vmem:[%s170 + $0x3c] sm:$0xf] %v1594
      %1613 = vst [vmem:[%s170 + $0x40] sm:$0xf] %v1595
      %1614 = vst [vmem:[%s170 + $0x44] sm:$0xf] %v1596
      %v1615 = vld [vmem:[#allocation2 + $0x95] sm:$0xff]
      %v1616 = vld [vmem:[#allocation2 + $0x9d] sm:$0xff]
      %v1617 = vld [vmem:[#allocation2 + $0xa5] sm:$0xff]
      %v1618 = vld [vmem:[#allocation2 + $0xad] sm:$0xff]
      %v1619 = vld [vmem:[#allocation2 + $0xb5] sm:$0xff]
      %v1620 = vld [vmem:[#allocation2 + $0xbd] sm:$0xff]
      %v1621 = vld [vmem:[#allocation2 + $0xc5] sm:$0xff]
      %v1622 = vld [vmem:[#allocation2 + $0xcd] sm:$0xff]
      %v1623 = vld [vmem:[#allocation2 + $0xd5] sm:$0xff]
      %v1624 = vld [vmem:[#allocation2 + $0xdd] sm:$0xff]
      %v1625 = vld [vmem:[#allocation2 + $0xe5] sm:$0xff]
      %v1626 = vld [vmem:[#allocation2 + $0xed] sm:$0xff]
      %v1627 = vld [vmem:[#allocation2 + $0xf5] sm:$0xff]
      %v1628 = vld [vmem:[#allocation2 + $0xfd] sm:$0xff]
      %v1629 = vld [vmem:[#allocation2 + $0x105] sm:$0xff]
      %v1630 = vld [vmem:[#allocation2 + $0x10d] sm:$0xff]
      %v1631 = vld [vmem:[#allocation2 + $0x115] sm:$0xff]
      %v1632 = vld [vmem:[#allocation2 + $0x11d] sm:$0xff]
      %v1633 = vld [vmem:[#allocation2 + $0x96] sm:$0xff]
      %v1634 = vld [vmem:[#allocation2 + $0x9e] sm:$0xff]
      %v1635 = vld [vmem:[#allocation2 + $0xa6] sm:$0xff]
      %v1636 = vld [vmem:[#allocation2 + $0xae] sm:$0xff]
      %v1637 = vld [vmem:[#allocation2 + $0xb6] sm:$0xff]
      %v1638 = vld [vmem:[#allocation2 + $0xbe] sm:$0xff]
      %v1639 = vld [vmem:[#allocation2 + $0xc6] sm:$0xff]
      %v1640 = vld [vmem:[#allocation2 + $0xce] sm:$0xff]
      %v1641 = vld [vmem:[#allocation2 + $0xd6] sm:$0xff]
      %v1642 = vld [vmem:[#allocation2 + $0xde] sm:$0xff]
      %v1643 = vld [vmem:[#allocation2 + $0xe6] sm:$0xff]
      %v1644 = vld [vmem:[#allocation2 + $0xee] sm:$0xff]
      %v1645 = vld [vmem:[#allocation2 + $0xf6] sm:$0xff]
      %v1646 = vld [vmem:[#allocation2 + $0xfe] sm:$0xff]
      %v1647 = vld [vmem:[#allocation2 + $0x106] sm:$0xff]
      %v1648 = vld [vmem:[#allocation2 + $0x10e] sm:$0xff]
      %v1649 = vld [vmem:[#allocation2 + $0x116] sm:$0xff]
      %v1650 = vld [vmem:[#allocation2 + $0x11e] sm:$0xff]
      %v1651 = vld [vmem:[#allocation2 + $0x97] sm:$0xff]
      %v1652 = vld [vmem:[#allocation2 + $0x9f] sm:$0xff]
      %v1653 = vld [vmem:[#allocation2 + $0xa7] sm:$0xff]
      %v1654 = vld [vmem:[#allocation2 + $0xaf] sm:$0xff]
      %v1655 = vld [vmem:[#allocation2 + $0xb7] sm:$0xff]
      %v1656 = vld [vmem:[#allocation2 + $0xbf] sm:$0xff]
      %v1657 = vld [vmem:[#allocation2 + $0xc7] sm:$0xff]
      %v1658 = vld [vmem:[#allocation2 + $0xcf] sm:$0xff]
      %v1659 = vld [vmem:[#allocation2 + $0xd7] sm:$0xff]
      %v1660 = vld [vmem:[#allocation2 + $0xdf] sm:$0xff]
      %v1661 = vld [vmem:[#allocation2 + $0xe7] sm:$0xff]
      %v1662 = vld [vmem:[#allocation2 + $0xef] sm:$0xff]
      %v1663 = vld [vmem:[#allocation2 + $0xf7] sm:$0xff]
      %v1664 = vld [vmem:[#allocation2 + $0xff] sm:$0xff]
      %v1665 = vld [vmem:[#allocation2 + $0x107] sm:$0xff]
      %v1666 = vld [vmem:[#allocation2 + $0x10f] sm:$0xff]
      %v1667 = vld [vmem:[#allocation2 + $0x117] sm:$0xff]
      %v1668 = vld [vmem:[#allocation2 + $0x11f] sm:$0xff]
      %v1669 = vld [vmem:[#allocation2 + $0x127] sm:$0xff]
      %v1670 = vld [vmem:[#allocation2 + $0x12f] sm:$0xff]
      %v1671 = vld [vmem:[#allocation2 + $0xa8] sm:$0xff]
      %v1672 = vld [vmem:[#allocation2 + $0xb0] sm:$0xff]
      %v1673 = vld [vmem:[#allocation2 + $0xb8] sm:$0xff]
      %v1674 = vld [vmem:[#allocation2 + $0xc0] sm:$0xff]
      %v1675 = vld [vmem:[#allocation2 + $0xc8] sm:$0xff]
      %v1676 = vld [vmem:[#allocation2 + $0xd0] sm:$0xff]
      %v1677 = vld [vmem:[#allocation2 + $0xd8] sm:$0xff]
      %v1678 = vld [vmem:[#allocation2 + $0xe0] sm:$0xff]
      %v1679 = vld [vmem:[#allocation2 + $0xe8] sm:$0xff]
      %v1680 = vld [vmem:[#allocation2 + $0xf0] sm:$0xff]
      %v1681 = vld [vmem:[#allocation2 + $0xf8] sm:$0xff]
      %v1682 = vld [vmem:[#allocation2 + $0x100] sm:$0xff]
      %v1683 = vld [vmem:[#allocation2 + $0x108] sm:$0xff]
      %v1684 = vld [vmem:[#allocation2 + $0x110] sm:$0xff]
      %v1685 = vld [vmem:[#allocation2 + $0x118] sm:$0xff]
      %v1686 = vld [vmem:[#allocation2 + $0x120] sm:$0xff]
      %v1687 = vld [vmem:[#allocation2 + $0x128] sm:$0xff]
      %v1688 = vld [vmem:[#allocation2 + $0x130] sm:$0xff]
      %v1689 = vld [vmem:[#allocation2 + $0xa9] sm:$0xff]
      %v1690 = vld [vmem:[#allocation2 + $0xb1] sm:$0xff]
      %v1691 = vld [vmem:[#allocation2 + $0xb9] sm:$0xff]
      %v1692 = vld [vmem:[#allocation2 + $0xc1] sm:$0xff]
      %v1693 = vld [vmem:[#allocation2 + $0xc9] sm:$0xff]
      %v1694 = vld [vmem:[#allocation2 + $0xd1] sm:$0xff]
      %v1695 = vld [vmem:[#allocation2 + $0xd9] sm:$0xff]
      %v1696 = vld [vmem:[#allocation2 + $0xe1] sm:$0xff]
      %v1697 = vld [vmem:[#allocation2 + $0xe9] sm:$0xff]
      %v1698 = vld [vmem:[#allocation2 + $0xf1] sm:$0xff]
      %v1699 = vld [vmem:[#allocation2 + $0xf9] sm:$0xff]
      %v1700 = vld [vmem:[#allocation2 + $0x101] sm:$0xff]
      %v1701 = vld [vmem:[#allocation2 + $0x109] sm:$0xff]
      %v1702 = vld [vmem:[#allocation2 + $0x111] sm:$0xff]
      %v1703 = vld [vmem:[#allocation2 + $0x119] sm:$0xff]
      %v1704 = vld [vmem:[#allocation2 + $0x121] sm:$0xff]
      %v1705 = vld [vmem:[#allocation2 + $0x129] sm:$0xff]
      %v1706 = vld [vmem:[#allocation2 + $0x131] sm:$0xff]
      %v1707 = vld [vmem:[#allocation2 + $0x139] sm:$0xff]
      %v1708 = vld [vmem:[#allocation2 + $0x141] sm:$0xff]
      %v1709 = vld [vmem:[#allocation2 + $0xba] sm:$0xff]
      %v1710 = vld [vmem:[#allocation2 + $0xc2] sm:$0xff]
      %v1711 = vld [vmem:[#allocation2 + $0xca] sm:$0xff]
      %v1712 = vld [vmem:[#allocation2 + $0xd2] sm:$0xff]
      %v1713 = vld [vmem:[#allocation2 + $0xda] sm:$0xff]
      %v1714 = vld [vmem:[#allocation2 + $0xe2] sm:$0xff]
      %v1715 = vld [vmem:[#allocation2 + $0xea] sm:$0xff]
      %v1716 = vld [vmem:[#allocation2 + $0xf2] sm:$0xff]
      %v1717 = vld [vmem:[#allocation2 + $0xfa] sm:$0xff]
      %v1718 = vld [vmem:[#allocation2 + $0x102] sm:$0xff]
      %v1719 = vld [vmem:[#allocation2 + $0x10a] sm:$0xff]
      %v1720 = vld [vmem:[#allocation2 + $0x112] sm:$0xff]
      %v1721 = vld [vmem:[#allocation2 + $0x11a] sm:$0xff]
      %v1722 = vld [vmem:[#allocation2 + $0x122] sm:$0xff]
      %v1723 = vld [vmem:[#allocation2 + $0x12a] sm:$0xff]
      %v1724 = vld [vmem:[#allocation2 + $0x132] sm:$0xff]
      %v1725 = vld [vmem:[#allocation2 + $0x13a] sm:$0xff]
      %v1726 = vld [vmem:[#allocation2 + $0x142] sm:$0xff]
      %v1727 = vld [vmem:[#allocation2 + $0xbb] sm:$0xff]
      %v1728 = vld [vmem:[#allocation2 + $0xc3] sm:$0xff]
      %v1729 = vld [vmem:[#allocation2 + $0xcb] sm:$0xff]
      %v1730 = vld [vmem:[#allocation2 + $0xd3] sm:$0xff]
      %v1731 = vld [vmem:[#allocation2 + $0xdb] sm:$0xff]
      %v1732 = vld [vmem:[#allocation2 + $0xe3] sm:$0xff]
      %v1733 = vld [vmem:[#allocation2 + $0xeb] sm:$0xff]
      %v1734 = vld [vmem:[#allocation2 + $0xf3] sm:$0xff]
      %v1735 = vld [vmem:[#allocation2 + $0xfb] sm:$0xff]
      %v1736 = vld [vmem:[#allocation2 + $0x103] sm:$0xff]
      %v1737 = vld [vmem:[#allocation2 + $0x10b] sm:$0xff]
      %v1738 = vld [vmem:[#allocation2 + $0x113] sm:$0xff]
      %v1739 = vld [vmem:[#allocation2 + $0x11b] sm:$0xff]
      %v1740 = vld [vmem:[#allocation2 + $0x123] sm:$0xff]
      %v1741 = vld [vmem:[#allocation2 + $0x12b] sm:$0xff]
      %v1742 = vld [vmem:[#allocation2 + $0x133] sm:$0xff]
      %v1743 = vld [vmem:[#allocation2 + $0x13b] sm:$0xff]
      %v1744 = vld [vmem:[#allocation2 + $0x143] sm:$0xff]
      %1763 = vrot.lane.b32.xlu0 %v1633, 8
      %v1764 = vpop.permute.xlu0 %1763
      %1765 = vrot.lane.b32.xlu0 %v1634, 8
      %v1766 = vpop.permute.xlu0 %1765
      %1767 = vrot.lane.b32.xlu0 %v1635, 8
      %v1768 = vpop.permute.xlu0 %1767
      %1769 = vrot.lane.b32.xlu0 %v1636, 8
      %v1770 = vpop.permute.xlu0 %1769
      %1771 = vrot.lane.b32.xlu0 %v1637, 8
      %v1772 = vpop.permute.xlu0 %1771
      %1773 = vrot.lane.b32.xlu0 %v1638, 8
      %v1774 = vpop.permute.xlu0 %1773
      %1775 = vrot.lane.b32.xlu0 %v1639, 8
      %v1776 = vpop.permute.xlu0 %1775
      %1777 = vrot.lane.b32.xlu0 %v1640, 8
      %v1778 = vpop.permute.xlu0 %1777
      %1779 = vrot.lane.b32.xlu0 %v1641, 8
      %v1780 = vpop.permute.xlu0 %1779
      %1781 = vrot.lane.b32.xlu0 %v1642, 8
      %v1782 = vpop.permute.xlu0 %1781
      %1783 = vrot.lane.b32.xlu0 %v1643, 8
      %v1784 = vpop.permute.xlu0 %1783
      %1785 = vrot.lane.b32.xlu0 %v1644, 8
      %v1786 = vpop.permute.xlu0 %1785
      %1787 = vrot.lane.b32.xlu0 %v1645, 8
      %v1788 = vpop.permute.xlu0 %1787
      %1789 = vrot.lane.b32.xlu0 %v1646, 8
      %v1790 = vpop.permute.xlu0 %1789
      %1791 = vrot.lane.b32.xlu0 %v1647, 8
      %v1792 = vpop.permute.xlu0 %1791
      %1793 = vrot.lane.b32.xlu0 %v1648, 8
      %v1794 = vpop.permute.xlu0 %1793
      %1795 = vrot.lane.b32.xlu0 %v1649, 8
      %v1796 = vpop.permute.xlu0 %1795
      %1797 = vrot.lane.b32.xlu0 %v1650, 8
      %v1798 = vpop.permute.xlu0 %1797
      %1835 = vrot.lane.b32.xlu0 %v1651, 16
      %v1836 = vpop.permute.xlu0 %1835
      %1837 = vrot.lane.b32.xlu0 %v1652, 16
      %v1838 = vpop.permute.xlu0 %1837
      %1839 = vrot.lane.b32.xlu0 %v1653, 16
      %v1840 = vpop.permute.xlu0 %1839
      %1841 = vrot.lane.b32.xlu0 %v1654, 16
      %v1842 = vpop.permute.xlu0 %1841
      %1843 = vrot.lane.b32.xlu0 %v1655, 16
      %v1844 = vpop.permute.xlu0 %1843
      %1845 = vrot.lane.b32.xlu0 %v1656, 16
      %v1846 = vpop.permute.xlu0 %1845
      %1847 = vrot.lane.b32.xlu0 %v1657, 16
      %v1848 = vpop.permute.xlu0 %1847
      %1849 = vrot.lane.b32.xlu0 %v1658, 16
      %v1850 = vpop.permute.xlu0 %1849
      %1851 = vrot.lane.b32.xlu0 %v1659, 16
      %v1852 = vpop.permute.xlu0 %1851
      %1853 = vrot.lane.b32.xlu0 %v1660, 16
      %v1854 = vpop.permute.xlu0 %1853
      %1855 = vrot.lane.b32.xlu0 %v1661, 16
      %v1856 = vpop.permute.xlu0 %1855
      %1857 = vrot.lane.b32.xlu0 %v1662, 16
      %v1858 = vpop.permute.xlu0 %1857
      %1859 = vrot.lane.b32.xlu0 %v1663, 16
      %v1860 = vpop.permute.xlu0 %1859
      %1861 = vrot.lane.b32.xlu0 %v1664, 16
      %v1862 = vpop.permute.xlu0 %1861
      %1863 = vrot.lane.b32.xlu0 %v1665, 16
      %v1864 = vpop.permute.xlu0 %1863
      %1865 = vrot.lane.b32.xlu0 %v1666, 16
      %v1866 = vpop.permute.xlu0 %1865
      %1867 = vrot.lane.b32.xlu0 %v1667, 16
      %v1868 = vpop.permute.xlu0 %1867
      %1869 = vrot.lane.b32.xlu0 %v1668, 16
      %v1870 = vpop.permute.xlu0 %1869
      %1891 = vrot.lane.b32.xlu0 %v1653, 24
      %v1892 = vpop.permute.xlu0 %1891
      %1893 = vrot.lane.b32.xlu0 %v1654, 24
      %v1894 = vpop.permute.xlu0 %1893
      %1895 = vrot.lane.b32.xlu0 %v1655, 24
      %v1896 = vpop.permute.xlu0 %1895
      %1897 = vrot.lane.b32.xlu0 %v1656, 24
      %v1898 = vpop.permute.xlu0 %1897
      %1899 = vrot.lane.b32.xlu0 %v1657, 24
      %v1900 = vpop.permute.xlu0 %1899
      %1901 = vrot.lane.b32.xlu0 %v1658, 24
      %v1902 = vpop.permute.xlu0 %1901
      %1903 = vrot.lane.b32.xlu0 %v1659, 24
      %v1904 = vpop.permute.xlu0 %1903
      %1905 = vrot.lane.b32.xlu0 %v1660, 24
      %v1906 = vpop.permute.xlu0 %1905
      %1907 = vrot.lane.b32.xlu0 %v1661, 24
      %v1908 = vpop.permute.xlu0 %1907
      %1909 = vrot.lane.b32.xlu0 %v1662, 24
      %v1910 = vpop.permute.xlu0 %1909
      %1911 = vrot.lane.b32.xlu0 %v1663, 24
      %v1912 = vpop.permute.xlu0 %1911
      %1913 = vrot.lane.b32.xlu0 %v1664, 24
      %v1914 = vpop.permute.xlu0 %1913
      %1915 = vrot.lane.b32.xlu0 %v1665, 24
      %v1916 = vpop.permute.xlu0 %1915
      %1917 = vrot.lane.b32.xlu0 %v1666, 24
      %v1918 = vpop.permute.xlu0 %1917
      %1919 = vrot.lane.b32.xlu0 %v1667, 24
      %v1920 = vpop.permute.xlu0 %1919
      %1921 = vrot.lane.b32.xlu0 %v1668, 24
      %v1922 = vpop.permute.xlu0 %1921
      %1923 = vrot.lane.b32.xlu0 %v1669, 24
      %v1924 = vpop.permute.xlu0 %1923
      %1925 = vrot.lane.b32.xlu0 %v1670, 24
      %v1926 = vpop.permute.xlu0 %1925
      %1963 = vrot.lane.b32.xlu0 %v1671, 32
      %v1964 = vpop.permute.xlu0 %1963
      %1965 = vrot.lane.b32.xlu0 %v1672, 32
      %v1966 = vpop.permute.xlu0 %1965
      %1967 = vrot.lane.b32.xlu0 %v1673, 32
      %v1968 = vpop.permute.xlu0 %1967
      %1969 = vrot.lane.b32.xlu0 %v1674, 32
      %v1970 = vpop.permute.xlu0 %1969
      %1971 = vrot.lane.b32.xlu0 %v1675, 32
      %v1972 = vpop.permute.xlu0 %1971
      %1973 = vrot.lane.b32.xlu0 %v1676, 32
      %v1974 = vpop.permute.xlu0 %1973
      %1975 = vrot.lane.b32.xlu0 %v1677, 32
      %v1976 = vpop.permute.xlu0 %1975
      %1977 = vrot.lane.b32.xlu0 %v1678, 32
      %v1978 = vpop.permute.xlu0 %1977
      %1979 = vrot.lane.b32.xlu0 %v1679, 32
      %v1980 = vpop.permute.xlu0 %1979
      %1981 = vrot.lane.b32.xlu0 %v1680, 32
      %v1982 = vpop.permute.xlu0 %1981
      %1983 = vrot.lane.b32.xlu0 %v1681, 32
      %v1984 = vpop.permute.xlu0 %1983
      %1985 = vrot.lane.b32.xlu0 %v1682, 32
      %v1986 = vpop.permute.xlu0 %1985
      %1987 = vrot.lane.b32.xlu0 %v1683, 32
      %v1988 = vpop.permute.xlu0 %1987
      %1989 = vrot.lane.b32.xlu0 %v1684, 32
      %v1990 = vpop.permute.xlu0 %1989
      %1991 = vrot.lane.b32.xlu0 %v1685, 32
      %v1992 = vpop.permute.xlu0 %1991
      %1993 = vrot.lane.b32.xlu0 %v1686, 32
      %v1994 = vpop.permute.xlu0 %1993
      %1995 = vrot.lane.b32.xlu0 %v1687, 32
      %v1996 = vpop.permute.xlu0 %1995
      %1997 = vrot.lane.b32.xlu0 %v1688, 32
      %v1998 = vpop.permute.xlu0 %1997
      %2035 = vrot.lane.b32.xlu0 %v1689, 40
      %v2036 = vpop.permute.xlu0 %2035
      %2037 = vrot.lane.b32.xlu0 %v1690, 40
      %v2038 = vpop.permute.xlu0 %2037
      %2039 = vrot.lane.b32.xlu0 %v1691, 40
      %v2040 = vpop.permute.xlu0 %2039
      %2041 = vrot.lane.b32.xlu0 %v1692, 40
      %v2042 = vpop.permute.xlu0 %2041
      %2043 = vrot.lane.b32.xlu0 %v1693, 40
      %v2044 = vpop.permute.xlu0 %2043
      %2045 = vrot.lane.b32.xlu0 %v1694, 40
      %v2046 = vpop.permute.xlu0 %2045
      %2047 = vrot.lane.b32.xlu0 %v1695, 40
      %v2048 = vpop.permute.xlu0 %2047
      %2049 = vrot.lane.b32.xlu0 %v1696, 40
      %v2050 = vpop.permute.xlu0 %2049
      %2051 = vrot.lane.b32.xlu0 %v1697, 40
      %v2052 = vpop.permute.xlu0 %2051
      %2053 = vrot.lane.b32.xlu0 %v1698, 40
      %v2054 = vpop.permute.xlu0 %2053
      %2055 = vrot.lane.b32.xlu0 %v1699, 40
      %v2056 = vpop.permute.xlu0 %2055
      %2057 = vrot.lane.b32.xlu0 %v1700, 40
      %v2058 = vpop.permute.xlu0 %2057
      %2059 = vrot.lane.b32.xlu0 %v1701, 40
      %v2060 = vpop.permute.xlu0 %2059
      %2061 = vrot.lane.b32.xlu0 %v1702, 40
      %v2062 = vpop.permute.xlu0 %2061
      %2063 = vrot.lane.b32.xlu0 %v1703, 40
      %v2064 = vpop.permute.xlu0 %2063
      %2065 = vrot.lane.b32.xlu0 %v1704, 40
      %v2066 = vpop.permute.xlu0 %2065
      %2067 = vrot.lane.b32.xlu0 %v1705, 40
      %v2068 = vpop.permute.xlu0 %2067
      %2069 = vrot.lane.b32.xlu0 %v1706, 40
      %v2070 = vpop.permute.xlu0 %2069
      %2091 = vrot.lane.b32.xlu0 %v1691, 48
      %v2092 = vpop.permute.xlu0 %2091
      %2093 = vrot.lane.b32.xlu0 %v1692, 48
      %v2094 = vpop.permute.xlu0 %2093
      %2095 = vrot.lane.b32.xlu0 %v1693, 48
      %v2096 = vpop.permute.xlu0 %2095
      %2097 = vrot.lane.b32.xlu0 %v1694, 48
      %v2098 = vpop.permute.xlu0 %2097
      %2099 = vrot.lane.b32.xlu0 %v1695, 48
      %v2100 = vpop.permute.xlu0 %2099
      %2101 = vrot.lane.b32.xlu0 %v1696, 48
      %v2102 = vpop.permute.xlu0 %2101
      %2103 = vrot.lane.b32.xlu0 %v1697, 48
      %v2104 = vpop.permute.xlu0 %2103
      %2105 = vrot.lane.b32.xlu0 %v1698, 48
      %v2106 = vpop.permute.xlu0 %2105
      %2107 = vrot.lane.b32.xlu0 %v1699, 48
      %v2108 = vpop.permute.xlu0 %2107
      %2109 = vrot.lane.b32.xlu0 %v1700, 48
      %v2110 = vpop.permute.xlu0 %2109
      %2111 = vrot.lane.b32.xlu0 %v1701, 48
      %v2112 = vpop.permute.xlu0 %2111
      %2113 = vrot.lane.b32.xlu0 %v1702, 48
      %v2114 = vpop.permute.xlu0 %2113
      %2115 = vrot.lane.b32.xlu0 %v1703, 48
      %v2116 = vpop.permute.xlu0 %2115
      %2117 = vrot.lane.b32.xlu0 %v1704, 48
      %v2118 = vpop.permute.xlu0 %2117
      %2119 = vrot.lane.b32.xlu0 %v1705, 48
      %v2120 = vpop.permute.xlu0 %2119
      %2121 = vrot.lane.b32.xlu0 %v1706, 48
      %v2122 = vpop.permute.xlu0 %2121
      %2123 = vrot.lane.b32.xlu0 %v1707, 48
      %v2124 = vpop.permute.xlu0 %2123
      %2125 = vrot.lane.b32.xlu0 %v1708, 48
      %v2126 = vpop.permute.xlu0 %2125
      %2163 = vrot.lane.b32.xlu0 %v1709, 56
      %v2164 = vpop.permute.xlu0 %2163
      %2165 = vrot.lane.b32.xlu0 %v1710, 56
      %v2166 = vpop.permute.xlu0 %2165
      %2167 = vrot.lane.b32.xlu0 %v1711, 56
      %v2168 = vpop.permute.xlu0 %2167
      %2169 = vrot.lane.b32.xlu0 %v1712, 56
      %v2170 = vpop.permute.xlu0 %2169
      %2171 = vrot.lane.b32.xlu0 %v1713, 56
      %v2172 = vpop.permute.xlu0 %2171
      %2173 = vrot.lane.b32.xlu0 %v1714, 56
      %v2174 = vpop.permute.xlu0 %2173
      %2175 = vrot.lane.b32.xlu0 %v1715, 56
      %v2176 = vpop.permute.xlu0 %2175
      %2177 = vrot.lane.b32.xlu0 %v1716, 56
      %v2178 = vpop.permute.xlu0 %2177
      %2179 = vrot.lane.b32.xlu0 %v1717, 56
      %v2180 = vpop.permute.xlu0 %2179
      %2181 = vrot.lane.b32.xlu0 %v1718, 56
      %v2182 = vpop.permute.xlu0 %2181
      %2183 = vrot.lane.b32.xlu0 %v1719, 56
      %v2184 = vpop.permute.xlu0 %2183
      %2185 = vrot.lane.b32.xlu0 %v1720, 56
      %v2186 = vpop.permute.xlu0 %2185
      %2187 = vrot.lane.b32.xlu0 %v1721, 56
      %v2188 = vpop.permute.xlu0 %2187
      %2189 = vrot.lane.b32.xlu0 %v1722, 56
      %v2190 = vpop.permute.xlu0 %2189
      %2191 = vrot.lane.b32.xlu0 %v1723, 56
      %v2192 = vpop.permute.xlu0 %2191
      %2193 = vrot.lane.b32.xlu0 %v1724, 56
      %v2194 = vpop.permute.xlu0 %2193
      %2195 = vrot.lane.b32.xlu0 %v1725, 56
      %v2196 = vpop.permute.xlu0 %2195
      %2197 = vrot.lane.b32.xlu0 %v1726, 56
      %v2198 = vpop.permute.xlu0 %2197
      %2235 = vrot.lane.b32.xlu0 %v1727, 64
      %v2236 = vpop.permute.xlu0 %2235
      %2237 = vrot.lane.b32.xlu0 %v1728, 64
      %v2238 = vpop.permute.xlu0 %2237
      %2239 = vrot.lane.b32.xlu0 %v1729, 64
      %v2240 = vpop.permute.xlu0 %2239
      %2241 = vrot.lane.b32.xlu0 %v1730, 64
      %v2242 = vpop.permute.xlu0 %2241
      %2243 = vrot.lane.b32.xlu0 %v1731, 64
      %v2244 = vpop.permute.xlu0 %2243
      %2245 = vrot.lane.b32.xlu0 %v1732, 64
      %v2246 = vpop.permute.xlu0 %2245
      %2247 = vrot.lane.b32.xlu0 %v1733, 64
      %v2248 = vpop.permute.xlu0 %2247
      %2249 = vrot.lane.b32.xlu0 %v1734, 64
      %v2250 = vpop.permute.xlu0 %2249
      %2251 = vrot.lane.b32.xlu0 %v1735, 64
      %v2252 = vpop.permute.xlu0 %2251
      %2253 = vrot.lane.b32.xlu0 %v1736, 64
      %v2254 = vpop.permute.xlu0 %2253
      %2255 = vrot.lane.b32.xlu0 %v1737, 64
      %v2256 = vpop.permute.xlu0 %2255
      %2257 = vrot.lane.b32.xlu0 %v1738, 64
      %v2258 = vpop.permute.xlu0 %2257
      %2259 = vrot.lane.b32.xlu0 %v1739, 64
      %v2260 = vpop.permute.xlu0 %2259
      %2261 = vrot.lane.b32.xlu0 %v1740, 64
      %v2262 = vpop.permute.xlu0 %2261
      %2263 = vrot.lane.b32.xlu0 %v1741, 64
      %v2264 = vpop.permute.xlu0 %2263
      %2265 = vrot.lane.b32.xlu0 %v1742, 64
      %v2266 = vpop.permute.xlu0 %2265
      %2267 = vrot.lane.b32.xlu0 %v1743, 64
      %v2268 = vpop.permute.xlu0 %2267
      %2269 = vrot.lane.b32.xlu0 %v1744, 64
      %v2270 = vpop.permute.xlu0 %2269
      %v2289 = vsel %vm172, %v1615, %v1764
      %v2290 = vsel %vm172, %v1616, %v1766
      %v2291 = vsel %vm172, %v1617, %v1768
      %v2292 = vsel %vm172, %v1618, %v1770
      %v2293 = vsel %vm172, %v1619, %v1772
      %v2294 = vsel %vm172, %v1620, %v1774
      %v2295 = vsel %vm172, %v1621, %v1776
      %v2296 = vsel %vm172, %v1622, %v1778
      %v2297 = vsel %vm172, %v1623, %v1780
      %v2298 = vsel %vm172, %v1624, %v1782
      %v2299 = vsel %vm172, %v1625, %v1784
      %v2300 = vsel %vm172, %v1626, %v1786
      %v2301 = vsel %vm172, %v1627, %v1788
      %v2302 = vsel %vm172, %v1628, %v1790
      %v2303 = vsel %vm172, %v1629, %v1792
      %v2304 = vsel %vm172, %v1630, %v1794
      %v2305 = vsel %vm172, %v1631, %v1796
      %v2306 = vsel %vm172, %v1632, %v1798
      %v2307 = vsel %vm1279, %v2289, %v1836
      %v2308 = vsel %vm1279, %v2290, %v1838
      %v2309 = vsel %vm1279, %v2291, %v1840
      %v2310 = vsel %vm1279, %v2292, %v1842
      %v2311 = vsel %vm1279, %v2293, %v1844
      %v2312 = vsel %vm1279, %v2294, %v1846
      %v2313 = vsel %vm1279, %v2295, %v1848
      %v2314 = vsel %vm1279, %v2296, %v1850
      %v2315 = vsel %vm1279, %v2297, %v1852
      %v2316 = vsel %vm1279, %v2298, %v1854
      %v2317 = vsel %vm1279, %v2299, %v1856
      %v2318 = vsel %vm1279, %v2300, %v1858
      %v2319 = vsel %vm1279, %v2301, %v1860
      %v2320 = vsel %vm1279, %v2302, %v1862
      %v2321 = vsel %vm1279, %v2303, %v1864
      %v2322 = vsel %vm1279, %v2304, %v1866
      %v2323 = vsel %vm1279, %v2305, %v1868
      %v2324 = vsel %vm1279, %v2306, %v1870
      %v2325 = vsel %vm1298, %v2307, %v1892
      %v2326 = vsel %vm1298, %v2308, %v1894
      %v2327 = vsel %vm1298, %v2309, %v1896
      %v2328 = vsel %vm1298, %v2310, %v1898
      %v2329 = vsel %vm1298, %v2311, %v1900
      %v2330 = vsel %vm1298, %v2312, %v1902
      %v2331 = vsel %vm1298, %v2313, %v1904
      %v2332 = vsel %vm1298, %v2314, %v1906
      %v2333 = vsel %vm1298, %v2315, %v1908
      %v2334 = vsel %vm1298, %v2316, %v1910
      %v2335 = vsel %vm1298, %v2317, %v1912
      %v2336 = vsel %vm1298, %v2318, %v1914
      %v2337 = vsel %vm1298, %v2319, %v1916
      %v2338 = vsel %vm1298, %v2320, %v1918
      %v2339 = vsel %vm1298, %v2321, %v1920
      %v2340 = vsel %vm1298, %v2322, %v1922
      %v2341 = vsel %vm1298, %v2323, %v1924
      %v2342 = vsel %vm1298, %v2324, %v1926
      %v2343 = vsel %vm1317, %v2325, %v1964
      %v2344 = vsel %vm1317, %v2326, %v1966
      %v2345 = vsel %vm1317, %v2327, %v1968
      %v2346 = vsel %vm1317, %v2328, %v1970
      %v2347 = vsel %vm1317, %v2329, %v1972
      %v2348 = vsel %vm1317, %v2330, %v1974
      %v2349 = vsel %vm1317, %v2331, %v1976
      %v2350 = vsel %vm1317, %v2332, %v1978
      %v2351 = vsel %vm1317, %v2333, %v1980
      %v2352 = vsel %vm1317, %v2334, %v1982
      %v2353 = vsel %vm1317, %v2335, %v1984
      %v2354 = vsel %vm1317, %v2336, %v1986
      %v2355 = vsel %vm1317, %v2337, %v1988
      %v2356 = vsel %vm1317, %v2338, %v1990
      %v2357 = vsel %vm1317, %v2339, %v1992
      %v2358 = vsel %vm1317, %v2340, %v1994
      %v2359 = vsel %vm1317, %v2341, %v1996
      %v2360 = vsel %vm1317, %v2342, %v1998
      %v2361 = vsel %vm262, %v2343, %v2036
      %v2362 = vsel %vm262, %v2344, %v2038
      %v2363 = vsel %vm262, %v2345, %v2040
      %v2364 = vsel %vm262, %v2346, %v2042
      %v2365 = vsel %vm262, %v2347, %v2044
      %v2366 = vsel %vm262, %v2348, %v2046
      %v2367 = vsel %vm262, %v2349, %v2048
      %v2368 = vsel %vm262, %v2350, %v2050
      %v2369 = vsel %vm262, %v2351, %v2052
      %v2370 = vsel %vm262, %v2352, %v2054
      %v2371 = vsel %vm262, %v2353, %v2056
      %v2372 = vsel %vm262, %v2354, %v2058
      %v2373 = vsel %vm262, %v2355, %v2060
      %v2374 = vsel %vm262, %v2356, %v2062
      %v2375 = vsel %vm262, %v2357, %v2064
      %v2376 = vsel %vm262, %v2358, %v2066
      %v2377 = vsel %vm262, %v2359, %v2068
      %v2378 = vsel %vm262, %v2360, %v2070
      %v2379 = vsel %vm1354, %v2361, %v2092
      %v2380 = vsel %vm1354, %v2362, %v2094
      %v2381 = vsel %vm1354, %v2363, %v2096
      %v2382 = vsel %vm1354, %v2364, %v2098
      %v2383 = vsel %vm1354, %v2365, %v2100
      %v2384 = vsel %vm1354, %v2366, %v2102
      %v2385 = vsel %vm1354, %v2367, %v2104
      %v2386 = vsel %vm1354, %v2368, %v2106
      %v2387 = vsel %vm1354, %v2369, %v2108
      %v2388 = vsel %vm1354, %v2370, %v2110
      %v2389 = vsel %vm1354, %v2371, %v2112
      %v2390 = vsel %vm1354, %v2372, %v2114
      %v2391 = vsel %vm1354, %v2373, %v2116
      %v2392 = vsel %vm1354, %v2374, %v2118
      %v2393 = vsel %vm1354, %v2375, %v2120
      %v2394 = vsel %vm1354, %v2376, %v2122
      %v2395 = vsel %vm1354, %v2377, %v2124
      %v2396 = vsel %vm1354, %v2378, %v2126
      %v2397 = vsel %vm1373, %v2379, %v2164
      %v2398 = vsel %vm1373, %v2380, %v2166
      %v2399 = vsel %vm1373, %v2381, %v2168
      %v2400 = vsel %vm1373, %v2382, %v2170
      %v2401 = vsel %vm1373, %v2383, %v2172
      %v2402 = vsel %vm1373, %v2384, %v2174
      %v2403 = vsel %vm1373, %v2385, %v2176
      %v2404 = vsel %vm1373, %v2386, %v2178
      %v2405 = vsel %vm1373, %v2387, %v2180
      %v2406 = vsel %vm1373, %v2388, %v2182
      %v2407 = vsel %vm1373, %v2389, %v2184
      %v2408 = vsel %vm1373, %v2390, %v2186
      %v2409 = vsel %vm1373, %v2391, %v2188
      %v2410 = vsel %vm1373, %v2392, %v2190
      %v2411 = vsel %vm1373, %v2393, %v2192
      %v2412 = vsel %vm1373, %v2394, %v2194
      %v2413 = vsel %vm1373, %v2395, %v2196
      %v2414 = vsel %vm1373, %v2396, %v2198
      %v2415 = vsel %vm1392, %v2397, %v2236
      %v2416 = vsel %vm1392, %v2398, %v2238
      %v2417 = vsel %vm1392, %v2399, %v2240
      %v2418 = vsel %vm1392, %v2400, %v2242
      %v2419 = vsel %vm1392, %v2401, %v2244
      %v2420 = vsel %vm1392, %v2402, %v2246
      %v2421 = vsel %vm1392, %v2403, %v2248
      %v2422 = vsel %vm1392, %v2404, %v2250
      %v2423 = vsel %vm1392, %v2405, %v2252
      %v2424 = vsel %vm1392, %v2406, %v2254
      %v2425 = vsel %vm1392, %v2407, %v2256
      %v2426 = vsel %vm1392, %v2408, %v2258
      %v2427 = vsel %vm1392, %v2409, %v2260
      %v2428 = vsel %vm1392, %v2410, %v2262
      %v2429 = vsel %vm1392, %v2411, %v2264
      %v2430 = vsel %vm1392, %v2412, %v2266
      %v2431 = vsel %vm1392, %v2413, %v2268
      %v2432 = vsel %vm1392, %v2414, %v2270
      %v2433 = vsel %vm1411, %v2415, 1.0
      %v2434 = vsel %vm1411, %v2416, 1.0
      %v2435 = vsel %vm1411, %v2417, 1.0
      %v2436 = vsel %vm1411, %v2418, 1.0
      %v2437 = vsel %vm1411, %v2419, 1.0
      %v2438 = vsel %vm1411, %v2420, 1.0
      %v2439 = vsel %vm1411, %v2421, 1.0
      %v2440 = vsel %vm1411, %v2422, 1.0
      %v2441 = vsel %vm1411, %v2423, 1.0
      %v2442 = vsel %vm1411, %v2424, 1.0
      %v2443 = vsel %vm1411, %v2425, 1.0
      %v2444 = vsel %vm1411, %v2426, 1.0
      %v2445 = vsel %vm1411, %v2427, 1.0
      %v2446 = vsel %vm1411, %v2428, 1.0
      %v2447 = vsel %vm1411, %v2429, 1.0
      %v2448 = vsel %vm1411, %v2430, 1.0
      %v2449 = vsel %vm1411, %v2431, 1.0
      %v2450 = vsel %vm1411, %v2432, 1.0
      %v2451 = vpack.c.bf16 %v2434, %v2433
      %v2452 = vpack.c.bf16 %v2436, %v2435
      %v2453 = vpack.c.bf16 %v2438, %v2437
      %v2454 = vpack.c.bf16 %v2440, %v2439
      %v2455 = vpack.c.bf16 %v2442, %v2441
      %v2456 = vpack.c.bf16 %v2444, %v2443
      %v2457 = vpack.c.bf16 %v2446, %v2445
      %v2458 = vpack.c.bf16 %v2448, %v2447
      %v2459 = vpack.c.bf16 %v2450, %v2449
      %v2460 = vld [vmem:[%s2] sm:$0xf]
      %v2461 = vld [vmem:[%s2 + $0x4] sm:$0xf]
      %v2462 = vld [vmem:[%s2 + $0x8] sm:$0xf]
      %v2463 = vld [vmem:[%s2 + $0xc] sm:$0xf]
      %v2464 = vld [vmem:[%s2 + $0x10] sm:$0xf]
      %v2465 = vld [vmem:[%s2 + $0x14] sm:$0xf]
      %v2466 = vld [vmem:[%s2 + $0x18] sm:$0xf]
      %v2467 = vld [vmem:[%s2 + $0x1c] sm:$0xf]
      %v2468 = vld [vmem:[%s2 + $0x20] sm:$0xf]
      %v2469 = vld [vmem:[%s2 + $0x24] sm:$0xf]
      %v2480 = vunpack.c.l.b16 %v2460
      %v2481 = vunpack.c.l.b16 %v2461
      %v2482 = vunpack.c.l.b16 %v2462
      %v2483 = vunpack.c.l.b16 %v2463
      %v2484 = vunpack.c.l.b16 %v2464
      %v2485 = vunpack.c.l.b16 %v2465
      %v2486 = vunpack.c.l.b16 %v2466
      %v2487 = vunpack.c.l.b16 %v2467
      %v2488 = vunpack.c.l.b16 %v2468
      %v2489 = vunpack.c.l.b16 %v2469
      %v2490 = vpack.c.b16 %v2481, %v2480
      %v2491 = vpack.c.b16 %v2483, %v2482
      %v2492 = vpack.c.b16 %v2485, %v2484
      %v2493 = vpack.c.b16 %v2487, %v2486
      %v2494 = vpack.c.b16 %v2489, %v2488
      %v2501 = vsel %vm1479, %v2451, 0
      %v2504 = vsel %vm1479, %v2452, 0
      %v2507 = vsel %vm1479, %v2453, 0
      %v2510 = vsel %vm1479, %v2454, 0
      %v2513 = vsel %vm1479, %v2455, 0
      %v2516 = vsel %vm1479, %v2456, 0
      %v2519 = vsel %vm1479, %v2457, 0
      %v2522 = vsel %vm1479, %v2458, 0
      %v2525 = vsel %vm1479, %v2459, 0
      %2527 = vmatpush.bf16.msra.mxu0 0
      %2528 = vmatpush.bf16.msra.mxu0 0
      %2529 = vmatpush.bf16.msra.mxu0 0
      %2530 = vmatpush.bf16.msra.mxu0 %v2494
      %2531 = vmatpush.bf16.msra.mxu0 %v2493
      %2532 = vmatpush.bf16.msra.mxu0 %v2492
      %2533 = vmatpush.bf16.msra.mxu0 %v2491
      %2534 = vmatpush.bf16.msra.mxu0 %v2490
      %2535 = vmatmul.bf16.gmra.mxu0 %v2501
      %v2536 = vpop.f32.mrf.mxu0
      %v2537 = vadd.f32 0.0, %v2536
      %v2538 = vpop.f32.mrf.mxu0
      %v2539 = vadd.f32 0.0, %v2538
      %2540 = vmatmul.bf16.gmra.mxu0 %v2504
      %v2541 = vpop.f32.mrf.mxu0
      %v2542 = vadd.f32 0.0, %v2541
      %v2543 = vpop.f32.mrf.mxu0
      %v2544 = vadd.f32 0.0, %v2543
      %2545 = vmatmul.bf16.gmra.mxu0 %v2507
      %v2546 = vpop.f32.mrf.mxu0
      %v2547 = vadd.f32 0.0, %v2546
      %v2548 = vpop.f32.mrf.mxu0
      %v2549 = vadd.f32 0.0, %v2548
      %2550 = vmatmul.bf16.gmra.mxu0 %v2510
      %v2551 = vpop.f32.mrf.mxu0
      %v2552 = vadd.f32 0.0, %v2551
      %v2553 = vpop.f32.mrf.mxu0
      %v2554 = vadd.f32 0.0, %v2553
      %2555 = vmatmul.bf16.gmra.mxu0 %v2513
      %v2556 = vpop.f32.mrf.mxu0
      %v2557 = vadd.f32 0.0, %v2556
      %v2558 = vpop.f32.mrf.mxu0
      %v2559 = vadd.f32 0.0, %v2558
      %2560 = vmatmul.bf16.gmra.mxu0 %v2516
      %v2561 = vpop.f32.mrf.mxu0
      %v2562 = vadd.f32 0.0, %v2561
      %v2563 = vpop.f32.mrf.mxu0
      %v2564 = vadd.f32 0.0, %v2563
      %2565 = vmatmul.bf16.gmra.mxu0 %v2519
      %v2566 = vpop.f32.mrf.mxu0
      %v2567 = vadd.f32 0.0, %v2566
      %v2568 = vpop.f32.mrf.mxu0
      %v2569 = vadd.f32 0.0, %v2568
      %2570 = vmatmul.bf16.gmra.mxu0 %v2522
      %v2571 = vpop.f32.mrf.mxu0
      %v2572 = vadd.f32 0.0, %v2571
      %v2573 = vpop.f32.mrf.mxu0
      %v2574 = vadd.f32 0.0, %v2573
      %2575 = vmatmul.bf16.gmra.mxu0 %v2525
      %v2576 = vpop.f32.mrf.mxu0
      %v2577 = vadd.f32 0.0, %v2576
      %v2578 = vpop.f32.mrf.mxu0
      %v2579 = vadd.f32 0.0, %v2578
      %2580 = vdwg.mxu0
      %v2581 = vmax.f32 %v2537, 0.0
      %v2582 = vmax.f32 %v2539, 0.0
      %v2583 = vmax.f32 %v2542, 0.0
      %v2584 = vmax.f32 %v2544, 0.0
      %v2585 = vmax.f32 %v2547, 0.0
      %v2586 = vmax.f32 %v2549, 0.0
      %v2587 = vmax.f32 %v2552, 0.0
      %v2588 = vmax.f32 %v2554, 0.0
      %v2589 = vmax.f32 %v2557, 0.0
      %v2590 = vmax.f32 %v2559, 0.0
      %v2591 = vmax.f32 %v2562, 0.0
      %v2592 = vmax.f32 %v2564, 0.0
      %v2593 = vmax.f32 %v2567, 0.0
      %v2594 = vmax.f32 %v2569, 0.0
      %v2595 = vmax.f32 %v2572, 0.0
      %v2596 = vmax.f32 %v2574, 0.0
      %v2597 = vmax.f32 %v2577, 0.0
      %v2598 = vmax.f32 %v2579, 0.0
      %v2599 = vpack.c.bf16 %v2581, %v2581
      %v2600 = vpack.c.bf16 %v2582, %v2582
      %v2601 = vpack.c.bf16 %v2583, %v2583
      %v2602 = vpack.c.bf16 %v2584, %v2584
      %v2603 = vpack.c.bf16 %v2585, %v2585
      %v2604 = vpack.c.bf16 %v2586, %v2586
      %v2605 = vpack.c.bf16 %v2587, %v2587
      %v2606 = vpack.c.bf16 %v2588, %v2588
      %v2607 = vpack.c.bf16 %v2589, %v2589
      %v2608 = vpack.c.bf16 %v2590, %v2590
      %v2609 = vpack.c.bf16 %v2591, %v2591
      %v2610 = vpack.c.bf16 %v2592, %v2592
      %v2611 = vpack.c.bf16 %v2593, %v2593
      %v2612 = vpack.c.bf16 %v2594, %v2594
      %v2613 = vpack.c.bf16 %v2595, %v2595
      %v2614 = vpack.c.bf16 %v2596, %v2596
      %v2615 = vpack.c.bf16 %v2597, %v2597
      %v2616 = vpack.c.bf16 %v2598, %v2598
      %2617 = vst [vmem:[%s170 + $0x48] sm:$0xf] %v2599
      %2618 = vst [vmem:[%s170 + $0x4c] sm:$0xf] %v2600
      %2619 = vst [vmem:[%s170 + $0x50] sm:$0xf] %v2601
      %2620 = vst [vmem:[%s170 + $0x54] sm:$0xf] %v2602
      %2621 = vst [vmem:[%s170 + $0x58] sm:$0xf] %v2603
      %2622 = vst [vmem:[%s170 + $0x5c] sm:$0xf] %v2604
      %2623 = vst [vmem:[%s170 + $0x60] sm:$0xf] %v2605
      %2624 = vst [vmem:[%s170 + $0x64] sm:$0xf] %v2606
      %2625 = vst [vmem:[%s170 + $0x68] sm:$0xf] %v2607
      %2626 = vst [vmem:[%s170 + $0x6c] sm:$0xf] %v2608
      %2627 = vst [vmem:[%s170 + $0x70] sm:$0xf] %v2609
      %2628 = vst [vmem:[%s170 + $0x74] sm:$0xf] %v2610
      %2629 = vst [vmem:[%s170 + $0x78] sm:$0xf] %v2611
      %2630 = vst [vmem:[%s170 + $0x7c] sm:$0xf] %v2612
      %2631 = vst [vmem:[%s170 + $0x80] sm:$0xf] %v2613
      %2632 = vst [vmem:[%s170 + $0x84] sm:$0xf] %v2614
      %2633 = vst [vmem:[%s170 + $0x88] sm:$0xf] %v2615
      %2634 = vst [vmem:[%s170 + $0x8c] sm:$0xf] %v2616
      %p2635 = scmp.lt.s32.totalorder %s14, 1
      %s2636 = scalar_select %p2635, %s14, 1
      %s2637 = smul.addr %s2636, 36
      %s2638 = smul.addr %s2637, 4
      %s2639 = scalar_lea.vmem %s3, %s2638
      // Predicated region
      $region33: #{_cnn_forward.1} parent=31 // pred_check
        %p2640 = pneg %p100
      $region34: #{_cnn_forward.1} parent=31 // pred_check_branch
        %2642 = sbr.rel (%p2640) target = $region36
      $region35: #{_cnn_forward.1} parent=31 // pred_region
        _
      $region36: #{_cnn_forward.1} parent=31 // pred_fallthru
        _
    $region32: #{_cnn_forward.1} parent=5 // pred_fallthru
      _
    %p2643 = scmp.le.s32.totalorder 2, %s9
    // Predicated region
    $region37: #{_cnn_forward.1} parent=5 // pred_check
      %p2644 = pneg %p2643
    $region38: #{_cnn_forward.1} parent=5 // pred_check_branch
      %2646 = sbr.rel (%p2644) target = $region40
    $region39: #{_cnn_forward.1} parent=5 // pred_region
      %s2647 = ssub.s32 %s9, 2
      // Predicated region
      $region41: #{_cnn_forward.1} parent=39 // pred_check
        %p2648 = pneg %p106
      $region42: #{_cnn_forward.1} parent=39 // pred_check_branch
        %2650 = sbr.rel (%p2648) target = $region44
      $region43: #{_cnn_forward.1} parent=39 // pred_region
        %p2651 = scmp.lt.s32.totalorder %s15, 1
        %s2652 = scalar_select %p2651, %s15, 1
        %s2653 = smul.addr %s2652, 36
        %s2654 = smul.addr %s2653, 4
        %s2655 = scalar_lea.vmem %s3, %s2654
      $region44: #{_cnn_forward.1} parent=39 // pred_fallthru
        _
    $region40: #{_cnn_forward.1} parent=5 // pred_fallthru
      _
  $region6: #{_cnn_forward.1} parent=0 // loop_footer
    %s13 = sadd.s32 1, %s9
  $region7: #{_cnn_forward.1} parent=0 // loop_footer_branch
    %8 = sbr.rel target = $region3
  $region8: #{_cnn_forward.1} parent=0 // loop_exit
    _

</llo_original>
